<compile_context>
chip_gen: v6e
topology: v6e:2x2x1
jax: 0.10.0
libtpu: 0.0.40
codegen_flags: <defaults>
</compile_context>

<pallas_src>
import jax
import jax.numpy as jnp
from jax import lax
from jax.experimental import pallas as pl
from jax.experimental.pallas import tpu as pltpu


def lstm_packed_kernel(x_ref, lens_ref,
                       w_ih1_ref, w_hh1_ref, b1_ref,
                       w2_ref, b2_ref,
                       h2_out_ref,
                       xw1_ref):
    T, B, E = x_ref.shape
    H = w_hh1_ref.shape[0]
    G = 4 * H

    # ---- Hoisted layer-1 input projection: one (T*B, E) @ (E, 4H) matmul, bias folded.
    x_flat = x_ref[...].reshape(T * B, E)
    xw1_ref[...] = (jnp.dot(x_flat, w_ih1_ref[...],
                            preferred_element_type=jnp.float32)
                    + b1_ref[...]).reshape(T, B, G)

    # Loop-invariant operands (loaded / broadcast once, closed over by the loop body).
    w_hh1 = w_hh1_ref[...]                      # (H, 4H)
    w2 = w2_ref[...]                            # (2H, 4H)  == [W_ih2; W_hh2]
    b2b = jnp.broadcast_to(b2_ref[...], (B, G))  # hoisted broadcast
    lens = lens_ref[...]                        # (B, 1) int32

    def gates(g):
        # Full-width activation passes, then slice (PyTorch gate order i, f, g, o).
        sig = jax.nn.sigmoid(g)                 # (B, 4H)
        th = jnp.tanh(g)                        # (B, 4H)
        return sig[:, 0:H], sig[:, H:2 * H], th[:, 2 * H:3 * H], sig[:, 3 * H:4 * H]

    def step(t, carry):
        h1, c1, h2, c2 = carry
        valid = lens > t                        # (B, 1) bool, computed once per step

        # ---- layer 1: input term precomputed; single h @ W_hh matmul on the chain.
        g1 = xw1_ref[t] + jnp.dot(h1, w_hh1, preferred_element_type=jnp.float32)
        i1, f1, gg1, o1 = gates(g1)
        c1n = f1 * c1 + i1 * gg1
        h1n = o1 * jnp.tanh(c1n)
        h1 = jnp.where(valid, h1n, h1)
        c1 = jnp.where(valid, c1n, c1)

        # ---- layer 2: single fused matmul  [h1, h2_prev] @ [W_ih2; W_hh2]
        g2 = jnp.dot(jnp.concatenate([h1, h2], axis=-1), w2,
                     preferred_element_type=jnp.float32) + b2b
        i2, f2, gg2, o2 = gates(g2)
        c2n = f2 * c2 + i2 * gg2
        h2n = o2 * jnp.tanh(c2n)
        h2 = jnp.where(valid, h2n, h2)
        c2 = jnp.where(valid, c2n, c2)
        return h1, c1, h2, c2

    zeros = jnp.zeros((B, H), jnp.float32)
    # T is small & static -> full unroll gives the scheduler cross-step visibility.
    _, _, h2, _ = lax.fori_loop(0, T, step, (zeros, zeros, zeros, zeros), unroll=True)

    h2_out_ref[...] = h2


def lstm_packed_forward(tokens, lengths, p):
    """tokens: (B, T) int32 in [0, 13);  lengths: (B,) int32."""
    B, T = tokens.shape
    E = p["emb"].shape[1]
    H = p["w_hh_l0"].shape[1]

    # Pad batch to the f32 sublane count (8). Padded rows get length 0 -> state stays 0.
    B_pad = max(8, ((B + 7) // 8) * 8)
    tokens_p = jnp.zeros((B_pad, T), jnp.int32).at[:B].set(tokens)
    lens_p = jnp.zeros((B_pad,), jnp.int32).at[:B].set(lengths.astype(jnp.int32))

    emb = p["emb"][tokens_p].astype(jnp.float32)   # (B_pad, T, E) -- embedding gather (glue)
    x = jnp.transpose(emb, (1, 0, 2))              # (T, B_pad, E)  time-major

    # Weights transposed so the kernel computes x @ W; layer-2 weights stacked for fusion.
    w_ih1 = p["w_ih_l0"].T                                          # (E, 4H)
    w_hh1 = p["w_hh_l0"].T                                          # (H, 4H)
    b1 = (p["b_ih_l0"] + p["b_hh_l0"]).reshape(1, 4 * H)
    w2 = jnp.concatenate([p["w_ih_l1"].T, p["w_hh_l1"].T], axis=0)  # (2H, 4H)
    b2 = (p["b_ih_l1"] + p["b_hh_l1"]).reshape(1, 4 * H)
    lens2d = lens_p.reshape(B_pad, 1)                               # (B_pad, 1) int32

    # NOTE: weights could be cast to bf16 on v6e/v7x (f32 accumulation preserved);
    # kept f32 here since the recurrence is latency- not MXU-throughput-bound.
    vmem = pl.BlockSpec(memory_space=pltpu.MemorySpace.VMEM)
    h2 = pl.pallas_call(
        lstm_packed_kernel,
        out_shape=jax.ShapeDtypeStruct((B_pad, H), jnp.float32),
        in_specs=[vmem] * 7,
        out_specs=vmem,
        scratch_shapes=[pltpu.VMEM((T, B_pad, 4 * H), jnp.float32)],
    )(x, lens2d, w_ih1, w_hh1, b1, w2, b2)

    # fc(hidden[-1]) -- trivial (H, 1) matmul, done as a fused XLA op on the kernel output.
    return h2[:B] @ p["fc_w"].T + p["fc_b"]


def ref_forward(tokens, lengths, p):
    """Pure-JAX reference of the PyTorch forward (eval mode)."""
    x = p["emb"][tokens].astype(jnp.float32)           # (B, T, E)
    B, T, _ = x.shape
    H = p["w_hh_l0"].shape[1]

    def cell(xt, h, c, wih, whh, bih, bhh):
        g = xt @ wih.T + h @ whh.T + bih + bhh
        i = jax.nn.sigmoid(g[:, :H])
        f = jax.nn.sigmoid(g[:, H:2 * H])
        gg = jnp.tanh(g[:, 2 * H:3 * H])
        o = jax.nn.sigmoid(g[:, 3 * H:])
        c_new = f * c + i * gg
        return o * jnp.tanh(c_new), c_new

    h1 = c1 = h2 = c2 = jnp.zeros((B, H), jnp.float32)
    for t in range(T):
        m = (t < lengths)[:, None]
        h1n, c1n = cell(x[:, t], h1, c1, p["w_ih_l0"], p["w_hh_l0"], p["b_ih_l0"], p["b_hh_l0"])
        h1 = jnp.where(m, h1n, h1)
        c1 = jnp.where(m, c1n, c1)
        h2n, c2n = cell(h1, h2, c2, p["w_ih_l1"], p["w_hh_l1"], p["b_ih_l1"], p["b_hh_l1"])
        h2 = jnp.where(m, h2n, h2)
        c2 = jnp.where(m, c2n, c2)
    return h2 @ p["fc_w"].T + p["fc_b"]


def init_params(key, embd_size, hidden_size, vocab=13):
    ks = jax.random.split(key, 12)
    k = 1.0 / jnp.sqrt(jnp.float32(hidden_size))
    u = lambda kk, shape: jax.random.uniform(kk, shape, jnp.float32, -k, k)
    return {
        "emb": jax.random.normal(ks[0], (vocab, embd_size), jnp.float32),
        "w_ih_l0": u(ks[1], (4 * hidden_size, embd_size)),
        "w_hh_l0": u(ks[2], (4 * hidden_size, hidden_size)),
        "b_ih_l0": u(ks[3], (4 * hidden_size,)),
        "b_hh_l0": u(ks[4], (4 * hidden_size,)),
        "w_ih_l1": u(ks[5], (4 * hidden_size, hidden_size)),
        "w_hh_l1": u(ks[6], (4 * hidden_size, hidden_size)),
        "b_ih_l1": u(ks[7], (4 * hidden_size,)),
        "b_hh_l1": u(ks[8], (4 * hidden_size,)),
        "fc_w": u(ks[9], (1, hidden_size)),
        "fc_b": u(ks[10], (1,)),
    }


if __name__ == "__main__":
    B, T, E, H = 4, 8, 16, 32
    key = jax.random.PRNGKey(0)
    kp, kt = jax.random.split(key)

    params = init_params(kp, E, H)
    tokens = jax.random.randint(kt, (B, T), 0, 13, dtype=jnp.int32)
    lengths = jnp.array([8, 5, 3, 7], dtype=jnp.int32)

    out = lstm_packed_forward(tokens, lengths, params)
    out = jax.block_until_ready(out)

    ref = ref_forward(tokens, lengths, params)
    assert out.shape == (B, 1)
    assert jnp.allclose(out, ref, atol=1e-3, rtol=1e-3), (out, ref)

    print("KERNEL_OK")
</pallas_src>

<mosaic_0001>
module attributes {stable_mosaic.version = 11 : i64} {
  func.func @lstm_packed_kernel(%arg0: memref<8x8x16xf32, #tpu.memory_space<vmem>>, %arg1: memref<8x1xi32, #tpu.memory_space<vmem>>, %arg2: memref<16x128xf32, #tpu.memory_space<vmem>>, %arg3: memref<32x128xf32, #tpu.memory_space<vmem>>, %arg4: memref<1x128xf32, #tpu.memory_space<vmem>>, %arg5: memref<64x128xf32, #tpu.memory_space<vmem>>, %arg6: memref<1x128xf32, #tpu.memory_space<vmem>>, %arg7: memref<8x32xf32, #tpu.memory_space<vmem>>, %arg8: memref<8x8x128xf32, #tpu.memory_space<vmem>>) attributes {dimension_semantics = [], scalar_prefetch = 0 : i64, scratch_operands = 1 : i64, tpu.core_type = #tpu.core_type<tc>} {
    %c0 = arith.constant 0 : index
    %c0_0 = arith.constant 0 : index
    %c0_1 = arith.constant 0 : index
    %0 = vector.load %arg0[%c0, %c0_0, %c0_1] : memref<8x8x16xf32, #tpu.memory_space<vmem>>, vector<8x8x16xf32>
    %1 = vector.shape_cast %0 : vector<8x8x16xf32> to vector<64x16xf32>
    %c0_2 = arith.constant 0 : index
    %c0_3 = arith.constant 0 : index
    %2 = vector.load %arg2[%c0_2, %c0_3] : memref<16x128xf32, #tpu.memory_space<vmem>>, vector<16x128xf32>
    %cst = arith.constant dense<0.000000e+00> : vector<64x128xf32>
    %3 = tpu.matmul %1, %2, %cst {dimension_numbers = #tpu.dot_dimension_numbers<[1], [0], [0], [1], [0, 0, 1, 1], [], []>} : vector<64x16xf32>, vector<16x128xf32>, vector<64x128xf32> -> vector<64x128xf32>
    %c0_4 = arith.constant 0 : index
    %c0_5 = arith.constant 0 : index
    %4 = vector.load %arg4[%c0_4, %c0_5] : memref<1x128xf32, #tpu.memory_space<vmem>>, vector<1x128xf32>
    %5 = vector.broadcast %4 : vector<1x128xf32> to vector<64x128xf32>
    %6 = arith.addf %3, %5 : vector<64x128xf32>
    %7 = vector.shape_cast %6 : vector<64x128xf32> to vector<8x8x128xf32>
    %c0_6 = arith.constant 0 : index
    %c0_7 = arith.constant 0 : index
    %c0_8 = arith.constant 0 : index
    %8 = vector.load %arg8[%c0_6, %c0_7, %c0_8] : memref<8x8x128xf32, #tpu.memory_space<vmem>>, vector<8x8x128xf32>
    tpu.vector_store %arg8[%c0_6, %c0_7, %c0_8], %7 {strides = array<i32>} : memref<8x8x128xf32, #tpu.memory_space<vmem>>, vector<8x8x128xf32>,
    %c0_9 = arith.constant 0 : index
    %c0_10 = arith.constant 0 : index
    %9 = vector.load %arg3[%c0_9, %c0_10] : memref<32x128xf32, #tpu.memory_space<vmem>>, vector<32x128xf32>
    %c0_11 = arith.constant 0 : index
    %c0_12 = arith.constant 0 : index
    %10 = vector.load %arg5[%c0_11, %c0_12] : memref<64x128xf32, #tpu.memory_space<vmem>>, vector<64x128xf32>
    %c0_13 = arith.constant 0 : index
    %c0_14 = arith.constant 0 : index
    %11 = vector.load %arg6[%c0_13, %c0_14] : memref<1x128xf32, #tpu.memory_space<vmem>>, vector<1x128xf32>
    %12 = vector.shape_cast %11 : vector<1x128xf32> to vector<1x128xf32>
    %13 = vector.broadcast %12 : vector<1x128xf32> to vector<8x128xf32>
    %c0_15 = arith.constant 0 : index
    %c0_16 = arith.constant 0 : index
    %14 = vector.load %arg1[%c0_15, %c0_16] : memref<8x1xi32, #tpu.memory_space<vmem>>, vector<8x1xi32>
    %cst_17 = arith.constant 0.000000e+00 : f32
    %15 = vector.broadcast %cst_17 : f32 to vector<8x32xf32>
    %c0_i32 = arith.constant 0 : i32
    %16 = vector.broadcast %c0_i32 : i32 to vector<8x1xi32>
    %17 = arith.cmpi sgt, %14, %16 : vector<8x1xi32>
    %18 = arith.index_cast %c0_i32 : i32 to index
    %c0_18 = arith.constant 0 : index
    %c0_19 = arith.constant 0 : index
    %19 = vector.load %arg8[%18, %c0_18, %c0_19] : memref<8x8x128xf32, #tpu.memory_space<vmem>>, vector<1x8x128xf32>
    %20 = vector.shape_cast %19 : vector<1x8x128xf32> to vector<8x128xf32>
    %cst_20 = arith.constant dense<0.000000e+00> : vector<8x128xf32>
    %21 = tpu.matmul %15, %9, %cst_20 {dimension_numbers = #tpu.dot_dimension_numbers<[1], [0], [0], [1], [0, 0, 1, 1], [], []>} : vector<8x32xf32>, vector<32x128xf32>, vector<8x128xf32> -> vector<8x128xf32>
    %22 = arith.addf %20, %21 : vector<8x128xf32>
    %23 = arith.negf %22 : vector<8x128xf32>
    %24 = math.exp %23 : vector<8x128xf32>
    %cst_21 = arith.constant 1.000000e+00 : f32
    %25 = vector.broadcast %cst_21 : f32 to vector<8x128xf32>
    %26 = arith.addf %25, %24 : vector<8x128xf32>
    %27 = arith.divf %25, %26 : vector<8x128xf32>
    %28 = math.tanh %22 : vector<8x128xf32>
    %29 = vector.extract_strided_slice %27 {offsets = [0, 0], sizes = [8, 32], strides = [1, 1]} : vector<8x128xf32> to vector<8x32xf32>
    %30 = vector.extract_strided_slice %27 {offsets = [0, 32], sizes = [8, 32], strides = [1, 1]} : vector<8x128xf32> to vector<8x32xf32>
    %31 = vector.extract_strided_slice %28 {offsets = [0, 64], sizes = [8, 32], strides = [1, 1]} : vector<8x128xf32> to vector<8x32xf32>
    %32 = vector.extract_strided_slice %27 {offsets = [0, 96], sizes = [8, 32], strides = [1, 1]} : vector<8x128xf32> to vector<8x32xf32>
    %33 = arith.mulf %30, %15 : vector<8x32xf32>
    %34 = arith.mulf %29, %31 : vector<8x32xf32>
    %35 = arith.addf %33, %34 : vector<8x32xf32>
    %36 = math.tanh %35 : vector<8x32xf32>
    %37 = arith.mulf %32, %36 : vector<8x32xf32>
    %38 = vector.shape_cast %17 : vector<8x1xi1> to vector<8x1xi1>
    %39 = vector.broadcast %38 : vector<8x1xi1> to vector<8x32xi1>
    %40 = arith.select %39, %37, %15 : vector<8x32xi1>, vector<8x32xf32>
    %41 = vector.shape_cast %17 : vector<8x1xi1> to vector<8x1xi1>
    %42 = vector.broadcast %41 : vector<8x1xi1> to vector<8x32xi1>
    %43 = arith.select %42, %35, %15 : vector<8x32xi1>, vector<8x32xf32>
    %44 = tpu.concatenate %40, %15 in 1 : vector<8x32xf32>, vector<8x32xf32> -> vector<8x64xf32>
    %cst_22 = arith.constant dense<0.000000e+00> : vector<8x128xf32>
    %45 = tpu.matmul %44, %10, %cst_22 {dimension_numbers = #tpu.dot_dimension_numbers<[1], [0], [0], [1], [0, 0, 1, 1], [], []>} : vector<8x64xf32>, vector<64x128xf32>, vector<8x128xf32> -> vector<8x128xf32>
    %46 = arith.addf %45, %13 : vector<8x128xf32>
    %47 = arith.negf %46 : vector<8x128xf32>
    %48 = math.exp %47 : vector<8x128xf32>
    %cst_23 = arith.constant 1.000000e+00 : f32
    %49 = vector.broadcast %cst_23 : f32 to vector<8x128xf32>
    %50 = arith.addf %49, %48 : vector<8x128xf32>
    %51 = arith.divf %49, %50 : vector<8x128xf32>
    %52 = math.tanh %46 : vector<8x128xf32>
    %53 = vector.extract_strided_slice %51 {offsets = [0, 0], sizes = [8, 32], strides = [1, 1]} : vector<8x128xf32> to vector<8x32xf32>
    %54 = vector.extract_strided_slice %51 {offsets = [0, 32], sizes = [8, 32], strides = [1, 1]} : vector<8x128xf32> to vector<8x32xf32>
    %55 = vector.extract_strided_slice %52 {offsets = [0, 64], sizes = [8, 32], strides = [1, 1]} : vector<8x128xf32> to vector<8x32xf32>
    %56 = vector.extract_strided_slice %51 {offsets = [0, 96], sizes = [8, 32], strides = [1, 1]} : vector<8x128xf32> to vector<8x32xf32>
    %57 = arith.mulf %54, %15 : vector<8x32xf32>
    %58 = arith.mulf %53, %55 : vector<8x32xf32>
    %59 = arith.addf %57, %58 : vector<8x32xf32>
    %60 = math.tanh %59 : vector<8x32xf32>
    %61 = arith.mulf %56, %60 : vector<8x32xf32>
    %62 = vector.shape_cast %17 : vector<8x1xi1> to vector<8x1xi1>
    %63 = vector.broadcast %62 : vector<8x1xi1> to vector<8x32xi1>
    %64 = arith.select %63, %61, %15 : vector<8x32xi1>, vector<8x32xf32>
    %65 = vector.shape_cast %17 : vector<8x1xi1> to vector<8x1xi1>
    %66 = vector.broadcast %65 : vector<8x1xi1> to vector<8x32xi1>
    %67 = arith.select %66, %59, %15 : vector<8x32xi1>, vector<8x32xf32>
    %c1_i32 = arith.constant 1 : i32
    %68 = vector.broadcast %c1_i32 : i32 to vector<8x1xi32>
    %69 = arith.cmpi sgt, %14, %68 : vector<8x1xi32>
    %70 = arith.index_cast %c1_i32 : i32 to index
    %c0_24 = arith.constant 0 : index
    %c0_25 = arith.constant 0 : index
    %71 = vector.load %arg8[%70, %c0_24, %c0_25] : memref<8x8x128xf32, #tpu.memory_space<vmem>>, vector<1x8x128xf32>
    %72 = vector.shape_cast %71 : vector<1x8x128xf32> to vector<8x128xf32>
    %cst_26 = arith.constant dense<0.000000e+00> : vector<8x128xf32>
    %73 = tpu.matmul %40, %9, %cst_26 {dimension_numbers = #tpu.dot_dimension_numbers<[1], [0], [0], [1], [0, 0, 1, 1], [], []>} : vector<8x32xf32>, vector<32x128xf32>, vector<8x128xf32> -> vector<8x128xf32>
    %74 = arith.addf %72, %73 : vector<8x128xf32>
    %75 = arith.negf %74 : vector<8x128xf32>
    %76 = math.exp %75 : vector<8x128xf32>
    %cst_27 = arith.constant 1.000000e+00 : f32
    %77 = vector.broadcast %cst_27 : f32 to vector<8x128xf32>
    %78 = arith.addf %77, %76 : vector<8x128xf32>
    %79 = arith.divf %77, %78 : vector<8x128xf32>
    %80 = math.tanh %74 : vector<8x128xf32>
    %81 = vector.extract_strided_slice %79 {offsets = [0, 0], sizes = [8, 32], strides = [1, 1]} : vector<8x128xf32> to vector<8x32xf32>
    %82 = vector.extract_strided_slice %79 {offsets = [0, 32], sizes = [8, 32], strides = [1, 1]} : vector<8x128xf32> to vector<8x32xf32>
    %83 = vector.extract_strided_slice %80 {offsets = [0, 64], sizes = [8, 32], strides = [1, 1]} : vector<8x128xf32> to vector<8x32xf32>
    %84 = vector.extract_strided_slice %79 {offsets = [0, 96], sizes = [8, 32], strides = [1, 1]} : vector<8x128xf32> to vector<8x32xf32>
    %85 = arith.mulf %82, %43 : vector<8x32xf32>
    %86 = arith.mulf %81, %83 : vector<8x32xf32>
    %87 = arith.addf %85, %86 : vector<8x32xf32>
    %88 = math.tanh %87 : vector<8x32xf32>
    %89 = arith.mulf %84, %88 : vector<8x32xf32>
    %90 = vector.shape_cast %69 : vector<8x1xi1> to vector<8x1xi1>
    %91 = vector.broadcast %90 : vector<8x1xi1> to vector<8x32xi1>
    %92 = arith.select %91, %89, %40 : vector<8x32xi1>, vector<8x32xf32>
    %93 = vector.shape_cast %69 : vector<8x1xi1> to vector<8x1xi1>
    %94 = vector.broadcast %93 : vector<8x1xi1> to vector<8x32xi1>
    %95 = arith.select %94, %87, %43 : vector<8x32xi1>, vector<8x32xf32>
    %96 = tpu.concatenate %92, %64 in 1 : vector<8x32xf32>, vector<8x32xf32> -> vector<8x64xf32>
    %cst_28 = arith.constant dense<0.000000e+00> : vector<8x128xf32>
    %97 = tpu.matmul %96, %10, %cst_28 {dimension_numbers = #tpu.dot_dimension_numbers<[1], [0], [0], [1], [0, 0, 1, 1], [], []>} : vector<8x64xf32>, vector<64x128xf32>, vector<8x128xf32> -> vector<8x128xf32>
    %98 = arith.addf %97, %13 : vector<8x128xf32>
    %99 = arith.negf %98 : vector<8x128xf32>
    %100 = math.exp %99 : vector<8x128xf32>
    %cst_29 = arith.constant 1.000000e+00 : f32
    %101 = vector.broadcast %cst_29 : f32 to vector<8x128xf32>
    %102 = arith.addf %101, %100 : vector<8x128xf32>
    %103 = arith.divf %101, %102 : vector<8x128xf32>
    %104 = math.tanh %98 : vector<8x128xf32>
    %105 = vector.extract_strided_slice %103 {offsets = [0, 0], sizes = [8, 32], strides = [1, 1]} : vector<8x128xf32> to vector<8x32xf32>
    %106 = vector.extract_strided_slice %103 {offsets = [0, 32], sizes = [8, 32], strides = [1, 1]} : vector<8x128xf32> to vector<8x32xf32>
    %107 = vector.extract_strided_slice %104 {offsets = [0, 64], sizes = [8, 32], strides = [1, 1]} : vector<8x128xf32> to vector<8x32xf32>
    %108 = vector.extract_strided_slice %103 {offsets = [0, 96], sizes = [8, 32], strides = [1, 1]} : vector<8x128xf32> to vector<8x32xf32>
    %109 = arith.mulf %106, %67 : vector<8x32xf32>
    %110 = arith.mulf %105, %107 : vector<8x32xf32>
    %111 = arith.addf %109, %110 : vector<8x32xf32>
    %112 = math.tanh %111 : vector<8x32xf32>
    %113 = arith.mulf %108, %112 : vector<8x32xf32>
    %114 = vector.shape_cast %69 : vector<8x1xi1> to vector<8x1xi1>
    %115 = vector.broadcast %114 : vector<8x1xi1> to vector<8x32xi1>
    %116 = arith.select %115, %113, %64 : vector<8x32xi1>, vector<8x32xf32>
    %117 = vector.shape_cast %69 : vector<8x1xi1> to vector<8x1xi1>
    %118 = vector.broadcast %117 : vector<8x1xi1> to vector<8x32xi1>
    %119 = arith.select %118, %111, %67 : vector<8x32xi1>, vector<8x32xf32>
    %c2_i32 = arith.constant 2 : i32
    %120 = vector.broadcast %c2_i32 : i32 to vector<8x1xi32>
    %121 = arith.cmpi sgt, %14, %120 : vector<8x1xi32>
    %122 = arith.index_cast %c2_i32 : i32 to index
    %c0_30 = arith.constant 0 : index
    %c0_31 = arith.constant 0 : index
    %123 = vector.load %arg8[%122, %c0_30, %c0_31] : memref<8x8x128xf32, #tpu.memory_space<vmem>>, vector<1x8x128xf32>
    %124 = vector.shape_cast %123 : vector<1x8x128xf32> to vector<8x128xf32>
    %cst_32 = arith.constant dense<0.000000e+00> : vector<8x128xf32>
    %125 = tpu.matmul %92, %9, %cst_32 {dimension_numbers = #tpu.dot_dimension_numbers<[1], [0], [0], [1], [0, 0, 1, 1], [], []>} : vector<8x32xf32>, vector<32x128xf32>, vector<8x128xf32> -> vector<8x128xf32>
    %126 = arith.addf %124, %125 : vector<8x128xf32>
    %127 = arith.negf %126 : vector<8x128xf32>
    %128 = math.exp %127 : vector<8x128xf32>
    %cst_33 = arith.constant 1.000000e+00 : f32
    %129 = vector.broadcast %cst_33 : f32 to vector<8x128xf32>
    %130 = arith.addf %129, %128 : vector<8x128xf32>
    %131 = arith.divf %129, %130 : vector<8x128xf32>
    %132 = math.tanh %126 : vector<8x128xf32>
    %133 = vector.extract_strided_slice %131 {offsets = [0, 0], sizes = [8, 32], strides = [1, 1]} : vector<8x128xf32> to vector<8x32xf32>
    %134 = vector.extract_strided_slice %131 {offsets = [0, 32], sizes = [8, 32], strides = [1, 1]} : vector<8x128xf32> to vector<8x32xf32>
    %135 = vector.extract_strided_slice %132 {offsets = [0, 64], sizes = [8, 32], strides = [1, 1]} : vector<8x128xf32> to vector<8x32xf32>
    %136 = vector.extract_strided_slice %131 {offsets = [0, 96], sizes = [8, 32], strides = [1, 1]} : vector<8x128xf32> to vector<8x32xf32>
    %137 = arith.mulf %134, %95 : vector<8x32xf32>
    %138 = arith.mulf %133, %135 : vector<8x32xf32>
    %139 = arith.addf %137, %138 : vector<8x32xf32>
    %140 = math.tanh %139 : vector<8x32xf32>
    %141 = arith.mulf %136, %140 : vector<8x32xf32>
    %142 = vector.shape_cast %121 : vector<8x1xi1> to vector<8x1xi1>
    %143 = vector.broadcast %142 : vector<8x1xi1> to vector<8x32xi1>
    %144 = arith.select %143, %141, %92 : vector<8x32xi1>, vector<8x32xf32>
    %145 = vector.shape_cast %121 : vector<8x1xi1> to vector<8x1xi1>
    %146 = vector.broadcast %145 : vector<8x1xi1> to vector<8x32xi1>
    %147 = arith.select %146, %139, %95 : vector<8x32xi1>, vector<8x32xf32>
    %148 = tpu.concatenate %144, %116 in 1 : vector<8x32xf32>, vector<8x32xf32> -> vector<8x64xf32>
    %cst_34 = arith.constant dense<0.000000e+00> : vector<8x128xf32>
    %149 = tpu.matmul %148, %10, %cst_34 {dimension_numbers = #tpu.dot_dimension_numbers<[1], [0], [0], [1], [0, 0, 1, 1], [], []>} : vector<8x64xf32>, vector<64x128xf32>, vector<8x128xf32> -> vector<8x128xf32>
    %150 = arith.addf %149, %13 : vector<8x128xf32>
    %151 = arith.negf %150 : vector<8x128xf32>
    %152 = math.exp %151 : vector<8x128xf32>
    %cst_35 = arith.constant 1.000000e+00 : f32
    %153 = vector.broadcast %cst_35 : f32 to vector<8x128xf32>
    %154 = arith.addf %153, %152 : vector<8x128xf32>
    %155 = arith.divf %153, %154 : vector<8x128xf32>
    %156 = math.tanh %150 : vector<8x128xf32>
    %157 = vector.extract_strided_slice %155 {offsets = [0, 0], sizes = [8, 32], strides = [1, 1]} : vector<8x128xf32> to vector<8x32xf32>
    %158 = vector.extract_strided_slice %155 {offsets = [0, 32], sizes = [8, 32], strides = [1, 1]} : vector<8x128xf32> to vector<8x32xf32>
    %159 = vector.extract_strided_slice %156 {offsets = [0, 64], sizes = [8, 32], strides = [1, 1]} : vector<8x128xf32> to vector<8x32xf32>
    %160 = vector.extract_strided_slice %155 {offsets = [0, 96], sizes = [8, 32], strides = [1, 1]} : vector<8x128xf32> to vector<8x32xf32>
    %161 = arith.mulf %158, %119 : vector<8x32xf32>
    %162 = arith.mulf %157, %159 : vector<8x32xf32>
    %163 = arith.addf %161, %162 : vector<8x32xf32>
    %164 = math.tanh %163 : vector<8x32xf32>
    %165 = arith.mulf %160, %164 : vector<8x32xf32>
    %166 = vector.shape_cast %121 : vector<8x1xi1> to vector<8x1xi1>
    %167 = vector.broadcast %166 : vector<8x1xi1> to vector<8x32xi1>
    %168 = arith.select %167, %165, %116 : vector<8x32xi1>, vector<8x32xf32>
    %169 = vector.shape_cast %121 : vector<8x1xi1> to vector<8x1xi1>
    %170 = vector.broadcast %169 : vector<8x1xi1> to vector<8x32xi1>
    %171 = arith.select %170, %163, %119 : vector<8x32xi1>, vector<8x32xf32>
    %c3_i32 = arith.constant 3 : i32
    %172 = vector.broadcast %c3_i32 : i32 to vector<8x1xi32>
    %173 = arith.cmpi sgt, %14, %172 : vector<8x1xi32>
    %174 = arith.index_cast %c3_i32 : i32 to index
    %c0_36 = arith.constant 0 : index
    %c0_37 = arith.constant 0 : index
    %175 = vector.load %arg8[%174, %c0_36, %c0_37] : memref<8x8x128xf32, #tpu.memory_space<vmem>>, vector<1x8x128xf32>
    %176 = vector.shape_cast %175 : vector<1x8x128xf32> to vector<8x128xf32>
    %cst_38 = arith.constant dense<0.000000e+00> : vector<8x128xf32>
    %177 = tpu.matmul %144, %9, %cst_38 {dimension_numbers = #tpu.dot_dimension_numbers<[1], [0], [0], [1], [0, 0, 1, 1], [], []>} : vector<8x32xf32>, vector<32x128xf32>, vector<8x128xf32> -> vector<8x128xf32>
    %178 = arith.addf %176, %177 : vector<8x128xf32>
    %179 = arith.negf %178 : vector<8x128xf32>
    %180 = math.exp %179 : vector<8x128xf32>
    %cst_39 = arith.constant 1.000000e+00 : f32
    %181 = vector.broadcast %cst_39 : f32 to vector<8x128xf32>
    %182 = arith.addf %181, %180 : vector<8x128xf32>
    %183 = arith.divf %181, %182 : vector<8x128xf32>
    %184 = math.tanh %178 : vector<8x128xf32>
    %185 = vector.extract_strided_slice %183 {offsets = [0, 0], sizes = [8, 32], strides = [1, 1]} : vector<8x128xf32> to vector<8x32xf32>
    %186 = vector.extract_strided_slice %183 {offsets = [0, 32], sizes = [8, 32], strides = [1, 1]} : vector<8x128xf32> to vector<8x32xf32>
    %187 = vector.extract_strided_slice %184 {offsets = [0, 64], sizes = [8, 32], strides = [1, 1]} : vector<8x128xf32> to vector<8x32xf32>
    %188 = vector.extract_strided_slice %183 {offsets = [0, 96], sizes = [8, 32], strides = [1, 1]} : vector<8x128xf32> to vector<8x32xf32>
    %189 = arith.mulf %186, %147 : vector<8x32xf32>
    %190 = arith.mulf %185, %187 : vector<8x32xf32>
    %191 = arith.addf %189, %190 : vector<8x32xf32>
    %192 = math.tanh %191 : vector<8x32xf32>
    %193 = arith.mulf %188, %192 : vector<8x32xf32>
    %194 = vector.shape_cast %173 : vector<8x1xi1> to vector<8x1xi1>
    %195 = vector.broadcast %194 : vector<8x1xi1> to vector<8x32xi1>
    %196 = arith.select %195, %193, %144 : vector<8x32xi1>, vector<8x32xf32>
    %197 = vector.shape_cast %173 : vector<8x1xi1> to vector<8x1xi1>
    %198 = vector.broadcast %197 : vector<8x1xi1> to vector<8x32xi1>
    %199 = arith.select %198, %191, %147 : vector<8x32xi1>, vector<8x32xf32>
    %200 = tpu.concatenate %196, %168 in 1 : vector<8x32xf32>, vector<8x32xf32> -> vector<8x64xf32>
    %cst_40 = arith.constant dense<0.000000e+00> : vector<8x128xf32>
    %201 = tpu.matmul %200, %10, %cst_40 {dimension_numbers = #tpu.dot_dimension_numbers<[1], [0], [0], [1], [0, 0, 1, 1], [], []>} : vector<8x64xf32>, vector<64x128xf32>, vector<8x128xf32> -> vector<8x128xf32>
    %202 = arith.addf %201, %13 : vector<8x128xf32>
    %203 = arith.negf %202 : vector<8x128xf32>
    %204 = math.exp %203 : vector<8x128xf32>
    %cst_41 = arith.constant 1.000000e+00 : f32
    %205 = vector.broadcast %cst_41 : f32 to vector<8x128xf32>
    %206 = arith.addf %205, %204 : vector<8x128xf32>
    %207 = arith.divf %205, %206 : vector<8x128xf32>
    %208 = math.tanh %202 : vector<8x128xf32>
    %209 = vector.extract_strided_slice %207 {offsets = [0, 0], sizes = [8, 32], strides = [1, 1]} : vector<8x128xf32> to vector<8x32xf32>
    %210 = vector.extract_strided_slice %207 {offsets = [0, 32], sizes = [8, 32], strides = [1, 1]} : vector<8x128xf32> to vector<8x32xf32>
    %211 = vector.extract_strided_slice %208 {offsets = [0, 64], sizes = [8, 32], strides = [1, 1]} : vector<8x128xf32> to vector<8x32xf32>
    %212 = vector.extract_strided_slice %207 {offsets = [0, 96], sizes = [8, 32], strides = [1, 1]} : vector<8x128xf32> to vector<8x32xf32>
    %213 = arith.mulf %210, %171 : vector<8x32xf32>
    %214 = arith.mulf %209, %211 : vector<8x32xf32>
    %215 = arith.addf %213, %214 : vector<8x32xf32>
    %216 = math.tanh %215 : vector<8x32xf32>
    %217 = arith.mulf %212, %216 : vector<8x32xf32>
    %218 = vector.shape_cast %173 : vector<8x1xi1> to vector<8x1xi1>
    %219 = vector.broadcast %218 : vector<8x1xi1> to vector<8x32xi1>
    %220 = arith.select %219, %217, %168 : vector<8x32xi1>, vector<8x32xf32>
    %221 = vector.shape_cast %173 : vector<8x1xi1> to vector<8x1xi1>
    %222 = vector.broadcast %221 : vector<8x1xi1> to vector<8x32xi1>
    %223 = arith.select %222, %215, %171 : vector<8x32xi1>, vector<8x32xf32>
    %c4_i32 = arith.constant 4 : i32
    %224 = vector.broadcast %c4_i32 : i32 to vector<8x1xi32>
    %225 = arith.cmpi sgt, %14, %224 : vector<8x1xi32>
    %226 = arith.index_cast %c4_i32 : i32 to index
    %c0_42 = arith.constant 0 : index
    %c0_43 = arith.constant 0 : index
    %227 = vector.load %arg8[%226, %c0_42, %c0_43] : memref<8x8x128xf32, #tpu.memory_space<vmem>>, vector<1x8x128xf32>
    %228 = vector.shape_cast %227 : vector<1x8x128xf32> to vector<8x128xf32>
    %cst_44 = arith.constant dense<0.000000e+00> : vector<8x128xf32>
    %229 = tpu.matmul %196, %9, %cst_44 {dimension_numbers = #tpu.dot_dimension_numbers<[1], [0], [0], [1], [0, 0, 1, 1], [], []>} : vector<8x32xf32>, vector<32x128xf32>, vector<8x128xf32> -> vector<8x128xf32>
    %230 = arith.addf %228, %229 : vector<8x128xf32>
    %231 = arith.negf %230 : vector<8x128xf32>
    %232 = math.exp %231 : vector<8x128xf32>
    %cst_45 = arith.constant 1.000000e+00 : f32
    %233 = vector.broadcast %cst_45 : f32 to vector<8x128xf32>
    %234 = arith.addf %233, %232 : vector<8x128xf32>
    %235 = arith.divf %233, %234 : vector<8x128xf32>
    %236 = math.tanh %230 : vector<8x128xf32>
    %237 = vector.extract_strided_slice %235 {offsets = [0, 0], sizes = [8, 32], strides = [1, 1]} : vector<8x128xf32> to vector<8x32xf32>
    %238 = vector.extract_strided_slice %235 {offsets = [0, 32], sizes = [8, 32], strides = [1, 1]} : vector<8x128xf32> to vector<8x32xf32>
    %239 = vector.extract_strided_slice %236 {offsets = [0, 64], sizes = [8, 32], strides = [1, 1]} : vector<8x128xf32> to vector<8x32xf32>
    %240 = vector.extract_strided_slice %235 {offsets = [0, 96], sizes = [8, 32], strides = [1, 1]} : vector<8x128xf32> to vector<8x32xf32>
    %241 = arith.mulf %238, %199 : vector<8x32xf32>
    %242 = arith.mulf %237, %239 : vector<8x32xf32>
    %243 = arith.addf %241, %242 : vector<8x32xf32>
    %244 = math.tanh %243 : vector<8x32xf32>
    %245 = arith.mulf %240, %244 : vector<8x32xf32>
    %246 = vector.shape_cast %225 : vector<8x1xi1> to vector<8x1xi1>
    %247 = vector.broadcast %246 : vector<8x1xi1> to vector<8x32xi1>
    %248 = arith.select %247, %245, %196 : vector<8x32xi1>, vector<8x32xf32>
    %249 = vector.shape_cast %225 : vector<8x1xi1> to vector<8x1xi1>
    %250 = vector.broadcast %249 : vector<8x1xi1> to vector<8x32xi1>
    %251 = arith.select %250, %243, %199 : vector<8x32xi1>, vector<8x32xf32>
    %252 = tpu.concatenate %248, %220 in 1 : vector<8x32xf32>, vector<8x32xf32> -> vector<8x64xf32>
    %cst_46 = arith.constant dense<0.000000e+00> : vector<8x128xf32>
    %253 = tpu.matmul %252, %10, %cst_46 {dimension_numbers = #tpu.dot_dimension_numbers<[1], [0], [0], [1], [0, 0, 1, 1], [], []>} : vector<8x64xf32>, vector<64x128xf32>, vector<8x128xf32> -> vector<8x128xf32>
    %254 = arith.addf %253, %13 : vector<8x128xf32>
    %255 = arith.negf %254 : vector<8x128xf32>
    %256 = math.exp %255 : vector<8x128xf32>
    %cst_47 = arith.constant 1.000000e+00 : f32
    %257 = vector.broadcast %cst_47 : f32 to vector<8x128xf32>
    %258 = arith.addf %257, %256 : vector<8x128xf32>
    %259 = arith.divf %257, %258 : vector<8x128xf32>
    %260 = math.tanh %254 : vector<8x128xf32>
    %261 = vector.extract_strided_slice %259 {offsets = [0, 0], sizes = [8, 32], strides = [1, 1]} : vector<8x128xf32> to vector<8x32xf32>
    %262 = vector.extract_strided_slice %259 {offsets = [0, 32], sizes = [8, 32], strides = [1, 1]} : vector<8x128xf32> to vector<8x32xf32>
    %263 = vector.extract_strided_slice %260 {offsets = [0, 64], sizes = [8, 32], strides = [1, 1]} : vector<8x128xf32> to vector<8x32xf32>
    %264 = vector.extract_strided_slice %259 {offsets = [0, 96], sizes = [8, 32], strides = [1, 1]} : vector<8x128xf32> to vector<8x32xf32>
    %265 = arith.mulf %262, %223 : vector<8x32xf32>
    %266 = arith.mulf %261, %263 : vector<8x32xf32>
    %267 = arith.addf %265, %266 : vector<8x32xf32>
    %268 = math.tanh %267 : vector<8x32xf32>
    %269 = arith.mulf %264, %268 : vector<8x32xf32>
    %270 = vector.shape_cast %225 : vector<8x1xi1> to vector<8x1xi1>
    %271 = vector.broadcast %270 : vector<8x1xi1> to vector<8x32xi1>
    %272 = arith.select %271, %269, %220 : vector<8x32xi1>, vector<8x32xf32>
    %273 = vector.shape_cast %225 : vector<8x1xi1> to vector<8x1xi1>
    %274 = vector.broadcast %273 : vector<8x1xi1> to vector<8x32xi1>
    %275 = arith.select %274, %267, %223 : vector<8x32xi1>, vector<8x32xf32>
    %c5_i32 = arith.constant 5 : i32
    %276 = vector.broadcast %c5_i32 : i32 to vector<8x1xi32>
    %277 = arith.cmpi sgt, %14, %276 : vector<8x1xi32>
    %278 = arith.index_cast %c5_i32 : i32 to index
    %c0_48 = arith.constant 0 : index
    %c0_49 = arith.constant 0 : index
    %279 = vector.load %arg8[%278, %c0_48, %c0_49] : memref<8x8x128xf32, #tpu.memory_space<vmem>>, vector<1x8x128xf32>
    %280 = vector.shape_cast %279 : vector<1x8x128xf32> to vector<8x128xf32>
    %cst_50 = arith.constant dense<0.000000e+00> : vector<8x128xf32>
    %281 = tpu.matmul %248, %9, %cst_50 {dimension_numbers = #tpu.dot_dimension_numbers<[1], [0], [0], [1], [0, 0, 1, 1], [], []>} : vector<8x32xf32>, vector<32x128xf32>, vector<8x128xf32> -> vector<8x128xf32>
    %282 = arith.addf %280, %281 : vector<8x128xf32>
    %283 = arith.negf %282 : vector<8x128xf32>
    %284 = math.exp %283 : vector<8x128xf32>
    %cst_51 = arith.constant 1.000000e+00 : f32
    %285 = vector.broadcast %cst_51 : f32 to vector<8x128xf32>
    %286 = arith.addf %285, %284 : vector<8x128xf32>
    %287 = arith.divf %285, %286 : vector<8x128xf32>
    %288 = math.tanh %282 : vector<8x128xf32>
    %289 = vector.extract_strided_slice %287 {offsets = [0, 0], sizes = [8, 32], strides = [1, 1]} : vector<8x128xf32> to vector<8x32xf32>
    %290 = vector.extract_strided_slice %287 {offsets = [0, 32], sizes = [8, 32], strides = [1, 1]} : vector<8x128xf32> to vector<8x32xf32>
    %291 = vector.extract_strided_slice %288 {offsets = [0, 64], sizes = [8, 32], strides = [1, 1]} : vector<8x128xf32> to vector<8x32xf32>
    %292 = vector.extract_strided_slice %287 {offsets = [0, 96], sizes = [8, 32], strides = [1, 1]} : vector<8x128xf32> to vector<8x32xf32>
    %293 = arith.mulf %290, %251 : vector<8x32xf32>
    %294 = arith.mulf %289, %291 : vector<8x32xf32>
    %295 = arith.addf %293, %294 : vector<8x32xf32>
    %296 = math.tanh %295 : vector<8x32xf32>
    %297 = arith.mulf %292, %296 : vector<8x32xf32>
    %298 = vector.shape_cast %277 : vector<8x1xi1> to vector<8x1xi1>
    %299 = vector.broadcast %298 : vector<8x1xi1> to vector<8x32xi1>
    %300 = arith.select %299, %297, %248 : vector<8x32xi1>, vector<8x32xf32>
    %301 = vector.shape_cast %277 : vector<8x1xi1> to vector<8x1xi1>
    %302 = vector.broadcast %301 : vector<8x1xi1> to vector<8x32xi1>
    %303 = arith.select %302, %295, %251 : vector<8x32xi1>, vector<8x32xf32>
    %304 = tpu.concatenate %300, %272 in 1 : vector<8x32xf32>, vector<8x32xf32> -> vector<8x64xf32>
    %cst_52 = arith.constant dense<0.000000e+00> : vector<8x128xf32>
    %305 = tpu.matmul %304, %10, %cst_52 {dimension_numbers = #tpu.dot_dimension_numbers<[1], [0], [0], [1], [0, 0, 1, 1], [], []>} : vector<8x64xf32>, vector<64x128xf32>, vector<8x128xf32> -> vector<8x128xf32>
    %306 = arith.addf %305, %13 : vector<8x128xf32>
    %307 = arith.negf %306 : vector<8x128xf32>
    %308 = math.exp %307 : vector<8x128xf32>
    %cst_53 = arith.constant 1.000000e+00 : f32
    %309 = vector.broadcast %cst_53 : f32 to vector<8x128xf32>
    %310 = arith.addf %309, %308 : vector<8x128xf32>
    %311 = arith.divf %309, %310 : vector<8x128xf32>
    %312 = math.tanh %306 : vector<8x128xf32>
    %313 = vector.extract_strided_slice %311 {offsets = [0, 0], sizes = [8, 32], strides = [1, 1]} : vector<8x128xf32> to vector<8x32xf32>
    %314 = vector.extract_strided_slice %311 {offsets = [0, 32], sizes = [8, 32], strides = [1, 1]} : vector<8x128xf32> to vector<8x32xf32>
    %315 = vector.extract_strided_slice %312 {offsets = [0, 64], sizes = [8, 32], strides = [1, 1]} : vector<8x128xf32> to vector<8x32xf32>
    %316 = vector.extract_strided_slice %311 {offsets = [0, 96], sizes = [8, 32], strides = [1, 1]} : vector<8x128xf32> to vector<8x32xf32>
    %317 = arith.mulf %314, %275 : vector<8x32xf32>
    %318 = arith.mulf %313, %315 : vector<8x32xf32>
    %319 = arith.addf %317, %318 : vector<8x32xf32>
    %320 = math.tanh %319 : vector<8x32xf32>
    %321 = arith.mulf %316, %320 : vector<8x32xf32>
    %322 = vector.shape_cast %277 : vector<8x1xi1> to vector<8x1xi1>
    %323 = vector.broadcast %322 : vector<8x1xi1> to vector<8x32xi1>
    %324 = arith.select %323, %321, %272 : vector<8x32xi1>, vector<8x32xf32>
    %325 = vector.shape_cast %277 : vector<8x1xi1> to vector<8x1xi1>
    %326 = vector.broadcast %325 : vector<8x1xi1> to vector<8x32xi1>
    %327 = arith.select %326, %319, %275 : vector<8x32xi1>, vector<8x32xf32>
    %c6_i32 = arith.constant 6 : i32
    %328 = vector.broadcast %c6_i32 : i32 to vector<8x1xi32>
    %329 = arith.cmpi sgt, %14, %328 : vector<8x1xi32>
    %330 = arith.index_cast %c6_i32 : i32 to index
    %c0_54 = arith.constant 0 : index
    %c0_55 = arith.constant 0 : index
    %331 = vector.load %arg8[%330, %c0_54, %c0_55] : memref<8x8x128xf32, #tpu.memory_space<vmem>>, vector<1x8x128xf32>
    %332 = vector.shape_cast %331 : vector<1x8x128xf32> to vector<8x128xf32>
    %cst_56 = arith.constant dense<0.000000e+00> : vector<8x128xf32>
    %333 = tpu.matmul %300, %9, %cst_56 {dimension_numbers = #tpu.dot_dimension_numbers<[1], [0], [0], [1], [0, 0, 1, 1], [], []>} : vector<8x32xf32>, vector<32x128xf32>, vector<8x128xf32> -> vector<8x128xf32>
    %334 = arith.addf %332, %333 : vector<8x128xf32>
    %335 = arith.negf %334 : vector<8x128xf32>
    %336 = math.exp %335 : vector<8x128xf32>
    %cst_57 = arith.constant 1.000000e+00 : f32
    %337 = vector.broadcast %cst_57 : f32 to vector<8x128xf32>
    %338 = arith.addf %337, %336 : vector<8x128xf32>
    %339 = arith.divf %337, %338 : vector<8x128xf32>
    %340 = math.tanh %334 : vector<8x128xf32>
    %341 = vector.extract_strided_slice %339 {offsets = [0, 0], sizes = [8, 32], strides = [1, 1]} : vector<8x128xf32> to vector<8x32xf32>
    %342 = vector.extract_strided_slice %339 {offsets = [0, 32], sizes = [8, 32], strides = [1, 1]} : vector<8x128xf32> to vector<8x32xf32>
    %343 = vector.extract_strided_slice %340 {offsets = [0, 64], sizes = [8, 32], strides = [1, 1]} : vector<8x128xf32> to vector<8x32xf32>
    %344 = vector.extract_strided_slice %339 {offsets = [0, 96], sizes = [8, 32], strides = [1, 1]} : vector<8x128xf32> to vector<8x32xf32>
    %345 = arith.mulf %342, %303 : vector<8x32xf32>
    %346 = arith.mulf %341, %343 : vector<8x32xf32>
    %347 = arith.addf %345, %346 : vector<8x32xf32>
    %348 = math.tanh %347 : vector<8x32xf32>
    %349 = arith.mulf %344, %348 : vector<8x32xf32>
    %350 = vector.shape_cast %329 : vector<8x1xi1> to vector<8x1xi1>
    %351 = vector.broadcast %350 : vector<8x1xi1> to vector<8x32xi1>
    %352 = arith.select %351, %349, %300 : vector<8x32xi1>, vector<8x32xf32>
    %353 = vector.shape_cast %329 : vector<8x1xi1> to vector<8x1xi1>
    %354 = vector.broadcast %353 : vector<8x1xi1> to vector<8x32xi1>
    %355 = arith.select %354, %347, %303 : vector<8x32xi1>, vector<8x32xf32>
    %356 = tpu.concatenate %352, %324 in 1 : vector<8x32xf32>, vector<8x32xf32> -> vector<8x64xf32>
    %cst_58 = arith.constant dense<0.000000e+00> : vector<8x128xf32>
    %357 = tpu.matmul %356, %10, %cst_58 {dimension_numbers = #tpu.dot_dimension_numbers<[1], [0], [0], [1], [0, 0, 1, 1], [], []>} : vector<8x64xf32>, vector<64x128xf32>, vector<8x128xf32> -> vector<8x128xf32>
    %358 = arith.addf %357, %13 : vector<8x128xf32>
    %359 = arith.negf %358 : vector<8x128xf32>
    %360 = math.exp %359 : vector<8x128xf32>
    %cst_59 = arith.constant 1.000000e+00 : f32
    %361 = vector.broadcast %cst_59 : f32 to vector<8x128xf32>
    %362 = arith.addf %361, %360 : vector<8x128xf32>
    %363 = arith.divf %361, %362 : vector<8x128xf32>
    %364 = math.tanh %358 : vector<8x128xf32>
    %365 = vector.extract_strided_slice %363 {offsets = [0, 0], sizes = [8, 32], strides = [1, 1]} : vector<8x128xf32> to vector<8x32xf32>
    %366 = vector.extract_strided_slice %363 {offsets = [0, 32], sizes = [8, 32], strides = [1, 1]} : vector<8x128xf32> to vector<8x32xf32>
    %367 = vector.extract_strided_slice %364 {offsets = [0, 64], sizes = [8, 32], strides = [1, 1]} : vector<8x128xf32> to vector<8x32xf32>
    %368 = vector.extract_strided_slice %363 {offsets = [0, 96], sizes = [8, 32], strides = [1, 1]} : vector<8x128xf32> to vector<8x32xf32>
    %369 = arith.mulf %366, %327 : vector<8x32xf32>
    %370 = arith.mulf %365, %367 : vector<8x32xf32>
    %371 = arith.addf %369, %370 : vector<8x32xf32>
    %372 = math.tanh %371 : vector<8x32xf32>
    %373 = arith.mulf %368, %372 : vector<8x32xf32>
    %374 = vector.shape_cast %329 : vector<8x1xi1> to vector<8x1xi1>
    %375 = vector.broadcast %374 : vector<8x1xi1> to vector<8x32xi1>
    %376 = arith.select %375, %373, %324 : vector<8x32xi1>, vector<8x32xf32>
    %377 = vector.shape_cast %329 : vector<8x1xi1> to vector<8x1xi1>
    %378 = vector.broadcast %377 : vector<8x1xi1> to vector<8x32xi1>
    %379 = arith.select %378, %371, %327 : vector<8x32xi1>, vector<8x32xf32>
    %c7_i32 = arith.constant 7 : i32
    %380 = vector.broadcast %c7_i32 : i32 to vector<8x1xi32>
    %381 = arith.cmpi sgt, %14, %380 : vector<8x1xi32>
    %382 = arith.index_cast %c7_i32 : i32 to index
    %c0_60 = arith.constant 0 : index
    %c0_61 = arith.constant 0 : index
    %383 = vector.load %arg8[%382, %c0_60, %c0_61] : memref<8x8x128xf32, #tpu.memory_space<vmem>>, vector<1x8x128xf32>
    %384 = vector.shape_cast %383 : vector<1x8x128xf32> to vector<8x128xf32>
    %cst_62 = arith.constant dense<0.000000e+00> : vector<8x128xf32>
    %385 = tpu.matmul %352, %9, %cst_62 {dimension_numbers = #tpu.dot_dimension_numbers<[1], [0], [0], [1], [0, 0, 1, 1], [], []>} : vector<8x32xf32>, vector<32x128xf32>, vector<8x128xf32> -> vector<8x128xf32>
    %386 = arith.addf %384, %385 : vector<8x128xf32>
    %387 = arith.negf %386 : vector<8x128xf32>
    %388 = math.exp %387 : vector<8x128xf32>
    %cst_63 = arith.constant 1.000000e+00 : f32
    %389 = vector.broadcast %cst_63 : f32 to vector<8x128xf32>
    %390 = arith.addf %389, %388 : vector<8x128xf32>
    %391 = arith.divf %389, %390 : vector<8x128xf32>
    %392 = math.tanh %386 : vector<8x128xf32>
    %393 = vector.extract_strided_slice %391 {offsets = [0, 0], sizes = [8, 32], strides = [1, 1]} : vector<8x128xf32> to vector<8x32xf32>
    %394 = vector.extract_strided_slice %391 {offsets = [0, 32], sizes = [8, 32], strides = [1, 1]} : vector<8x128xf32> to vector<8x32xf32>
    %395 = vector.extract_strided_slice %392 {offsets = [0, 64], sizes = [8, 32], strides = [1, 1]} : vector<8x128xf32> to vector<8x32xf32>
    %396 = vector.extract_strided_slice %391 {offsets = [0, 96], sizes = [8, 32], strides = [1, 1]} : vector<8x128xf32> to vector<8x32xf32>
    %397 = arith.mulf %394, %355 : vector<8x32xf32>
    %398 = arith.mulf %393, %395 : vector<8x32xf32>
    %399 = arith.addf %397, %398 : vector<8x32xf32>
    %400 = math.tanh %399 : vector<8x32xf32>
    %401 = arith.mulf %396, %400 : vector<8x32xf32>
    %402 = vector.shape_cast %381 : vector<8x1xi1> to vector<8x1xi1>
    %403 = vector.broadcast %402 : vector<8x1xi1> to vector<8x32xi1>
    %404 = arith.select %403, %401, %352 : vector<8x32xi1>, vector<8x32xf32>
    %405 = vector.shape_cast %381 : vector<8x1xi1> to vector<8x1xi1>
    %406 = vector.broadcast %405 : vector<8x1xi1> to vector<8x32xi1>
    %407 = arith.select %406, %399, %355 : vector<8x32xi1>, vector<8x32xf32>
    %408 = tpu.concatenate %404, %376 in 1 : vector<8x32xf32>, vector<8x32xf32> -> vector<8x64xf32>
    %cst_64 = arith.constant dense<0.000000e+00> : vector<8x128xf32>
    %409 = tpu.matmul %408, %10, %cst_64 {dimension_numbers = #tpu.dot_dimension_numbers<[1], [0], [0], [1], [0, 0, 1, 1], [], []>} : vector<8x64xf32>, vector<64x128xf32>, vector<8x128xf32> -> vector<8x128xf32>
    %410 = arith.addf %409, %13 : vector<8x128xf32>
    %411 = arith.negf %410 : vector<8x128xf32>
    %412 = math.exp %411 : vector<8x128xf32>
    %cst_65 = arith.constant 1.000000e+00 : f32
    %413 = vector.broadcast %cst_65 : f32 to vector<8x128xf32>
    %414 = arith.addf %413, %412 : vector<8x128xf32>
    %415 = arith.divf %413, %414 : vector<8x128xf32>
    %416 = math.tanh %410 : vector<8x128xf32>
    %417 = vector.extract_strided_slice %415 {offsets = [0, 0], sizes = [8, 32], strides = [1, 1]} : vector<8x128xf32> to vector<8x32xf32>
    %418 = vector.extract_strided_slice %415 {offsets = [0, 32], sizes = [8, 32], strides = [1, 1]} : vector<8x128xf32> to vector<8x32xf32>
    %419 = vector.extract_strided_slice %416 {offsets = [0, 64], sizes = [8, 32], strides = [1, 1]} : vector<8x128xf32> to vector<8x32xf32>
    %420 = vector.extract_strided_slice %415 {offsets = [0, 96], sizes = [8, 32], strides = [1, 1]} : vector<8x128xf32> to vector<8x32xf32>
    %421 = arith.mulf %418, %379 : vector<8x32xf32>
    %422 = arith.mulf %417, %419 : vector<8x32xf32>
    %423 = arith.addf %421, %422 : vector<8x32xf32>
    %424 = math.tanh %423 : vector<8x32xf32>
    %425 = arith.mulf %420, %424 : vector<8x32xf32>
    %426 = vector.shape_cast %381 : vector<8x1xi1> to vector<8x1xi1>
    %427 = vector.broadcast %426 : vector<8x1xi1> to vector<8x32xi1>
    %428 = arith.select %427, %425, %376 : vector<8x32xi1>, vector<8x32xf32>
    %429 = vector.shape_cast %381 : vector<8x1xi1> to vector<8x1xi1>
    %430 = vector.broadcast %429 : vector<8x1xi1> to vector<8x32xi1>
    %431 = arith.select %430, %423, %379 : vector<8x32xi1>, vector<8x32xf32>
    %c8_i32 = arith.constant 8 : i32
    %c0_66 = arith.constant 0 : index
    %c0_67 = arith.constant 0 : index
    %432 = vector.load %arg7[%c0_66, %c0_67] : memref<8x32xf32, #tpu.memory_space<vmem>>, vector<8x32xf32>
    tpu.vector_store %arg7[%c0_66, %c0_67], %428 {strides = array<i32>} : memref<8x32xf32, #tpu.memory_space<vmem>>, vector<8x32xf32>,
    return
  }
}

</mosaic_0001>

<llo_original>
// kernel: tpu_custom_call.1
$region0: #{tpu_custom_call.1}
  #allocation0 [shape = 'u32[]', space=smem, size = 0x4, offset = 0x4, fixed_abs, tag = 'smem constant byte address 0x4 - core index']
  #allocation1 [shape = 'u32[144,128]{1,0:T(1,128)}', space=vmem, size = 0x12000, scoped, tag = 'internal scratch']
  #allocation2 [shape = 'f32[8,8,128]{2,1,0:T(8,128)}', space=vmem, size = 0x8000, scoped, tag = 'scratch operand']
  %s0 = inlined_call_operand.hbm [shape: f32[8,8,16], index: 0, kind: input, shape index: {}]
  %s1 = inlined_call_operand.vmem [shape: s32[8,1], index: 1, kind: input, shape index: {}]
  %s2 = inlined_call_operand.hbm [shape: f32[16,128], index: 2, kind: input, shape index: {}]
  %s3 = inlined_call_operand.hbm [shape: f32[32,128], index: 3, kind: input, shape index: {}]
  %s4 = inlined_call_operand.vmem [shape: f32[1,128], index: 4, kind: input, shape index: {}]
  %s5 = inlined_call_operand.hbm [shape: f32[64,128], index: 5, kind: input, shape index: {}]
  %s6 = inlined_call_operand.vmem [shape: f32[1,128], index: 6, kind: input, shape index: {}]
  %s7 = inlined_call_operand.hbm [shape: f32[8,32], index: 7, kind: output, shape index: {}]
  %s8 = sld [smem:[#allocation0]]
  $region54: #{tpu_custom_call.1} parent=0
    _
  %s10 = ssub.s32 1, %s8
  %s11 = scalar_select 0, %s10, %s8
  $region1: #{tpu_custom_call.1} parent=0
    #allocation3 [shape = 'u8[32768]{0}', space=vmem, size = 0x8000, scoped, tag = 'input window, operand 0, single buffered']
    #allocation4 [shape = 's32[1]{0}', space=sflag, size = 0x4, scoped, tag = 'scoped memory for tpu_custom_call.1']
    #allocation5 [shape = 's32[1]{0}', space=sflag, size = 0x4, scoped, tag = 'scoped memory for tpu_custom_call.1']
    #allocation6 [shape = 'u8[8192]{0}', space=vmem, size = 0x2000, scoped, tag = 'input window, operand 2, single buffered']
    #allocation7 [shape = 's32[1]{0}', space=sflag, size = 0x4, scoped, tag = 'scoped memory for tpu_custom_call.1']
    #allocation8 [shape = 'u8[16384]{0}', space=vmem, size = 0x4000, scoped, tag = 'input window, operand 3, single buffered']
    #allocation9 [shape = 'u8[32768]{0}', space=vmem, size = 0x8000, scoped, tag = 'input window, operand 5, single buffered']
    #allocation10 [shape = 's32[1]{0}', space=sflag, size = 0x4, scoped, tag = 'scoped memory for tpu_custom_call.1']
    #allocation11 [shape = 'u8[4096]{0}', space=vmem, size = 0x1000, scoped, tag = 'output window, operand 0, single buffered']
    %12 = vsyncpa [#allocation4], 0
    %13 = vsyncpa [#allocation7], 0
    %14 = vsyncpa [#allocation10], 0
    %15 = vsyncpa [#allocation5], 0
    // Predicated region
    $region2: #{tpu_custom_call.1} parent=1 // pred_check
      _
    $region3: #{tpu_custom_call.1} parent=1 // pred_check_branch
      %17 = sbr.rel (0) target = $region5
    $region4: #{tpu_custom_call.1} parent=1 // pred_region
      %s19 = ssub.s32 1024, 1024
      %20 = vsyncadd [#allocation4], %s19
      %s21 = sshll.u32 [#allocation3], 4
      %s22 = int_to_ptr.vmem [resolvable:$true] %s21
      %27 = dma.hbm_to_vmem [thread:$0]  %s0, 1024, %s22, [#allocation4], 128, 128, 8
    $region5: #{tpu_custom_call.1} parent=1 // pred_fallthru
      _
    // Predicated region
    $region6: #{tpu_custom_call.1} parent=1 // pred_check
      _
    $region7: #{tpu_custom_call.1} parent=1 // pred_check_branch
      %29 = sbr.rel (0) target = $region9
    $region8: #{tpu_custom_call.1} parent=1 // pred_region
      _
    $region9: #{tpu_custom_call.1} parent=1 // pred_fallthru
      _
    // Predicated region
    $region10: #{tpu_custom_call.1} parent=1 // pred_check
      _
    $region11: #{tpu_custom_call.1} parent=1 // pred_check_branch
      %31 = sbr.rel (0) target = $region13
    $region12: #{tpu_custom_call.1} parent=1 // pred_region
      %s33 = ssub.s32 256, 256
      %34 = vsyncadd [#allocation7], %s33
      %s35 = sshll.u32 [#allocation6], 4
      %s36 = int_to_ptr.vmem [resolvable:$true] %s35
      %41 = dma.hbm_to_vmem [thread:$0]  %s2, 256, %s36, [#allocation7], 128, 128, 8
    $region13: #{tpu_custom_call.1} parent=1 // pred_fallthru
      _
    // Predicated region
    $region14: #{tpu_custom_call.1} parent=1 // pred_check
      _
    $region15: #{tpu_custom_call.1} parent=1 // pred_check_branch
      %43 = sbr.rel (0) target = $region17
    $region16: #{tpu_custom_call.1} parent=1 // pred_region
      %s45 = ssub.s32 512, 512
      %46 = vsyncadd [#allocation7], %s45
      %s47 = sshll.u32 [#allocation8], 4
      %s48 = int_to_ptr.vmem [resolvable:$true] %s47
      %53 = dma.hbm_to_vmem [thread:$0]  %s3, 512, %s48, [#allocation7], 128, 128, 8
    $region17: #{tpu_custom_call.1} parent=1 // pred_fallthru
      _
    // Predicated region
    $region18: #{tpu_custom_call.1} parent=1 // pred_check
      _
    $region19: #{tpu_custom_call.1} parent=1 // pred_check_branch
      %55 = sbr.rel (0) target = $region21
    $region20: #{tpu_custom_call.1} parent=1 // pred_region
      _
    $region21: #{tpu_custom_call.1} parent=1 // pred_fallthru
      _
    // Predicated region
    $region22: #{tpu_custom_call.1} parent=1 // pred_check
      _
    $region23: #{tpu_custom_call.1} parent=1 // pred_check_branch
      %57 = sbr.rel (0) target = $region25
    $region24: #{tpu_custom_call.1} parent=1 // pred_region
      %s59 = ssub.s32 1024, 1024
      %60 = vsyncadd [#allocation10], %s59
      %s61 = sshll.u32 [#allocation9], 4
      %s62 = int_to_ptr.vmem [resolvable:$true] %s61
      %67 = dma.hbm_to_vmem [thread:$0]  %s5, 1024, %s62, [#allocation10], 128, 128, 8
    $region25: #{tpu_custom_call.1} parent=1 // pred_fallthru
      _
    // Predicated region
    $region26: #{tpu_custom_call.1} parent=1 // pred_check
      _
    $region27: #{tpu_custom_call.1} parent=1 // pred_check_branch
      %69 = sbr.rel (0) target = $region29
    $region28: #{tpu_custom_call.1} parent=1 // pred_region
      _
    $region29: #{tpu_custom_call.1} parent=1 // pred_fallthru
      _
    // Predicated region
    $region30: #{tpu_custom_call.1} parent=1 // pred_check
      _
    $region31: #{tpu_custom_call.1} parent=1 // pred_check_branch
      %71 = sbr.rel (0) target = $region33
    $region32: #{tpu_custom_call.1} parent=1 // pred_region
      %72 = dma.done [#allocation4], 1024
    $region33: #{tpu_custom_call.1} parent=1 // pred_fallthru
      _
    // Predicated region
    $region34: #{tpu_custom_call.1} parent=1 // pred_check
      _
    $region35: #{tpu_custom_call.1} parent=1 // pred_check_branch
      %74 = sbr.rel (0) target = $region37
    $region36: #{tpu_custom_call.1} parent=1 // pred_region
      %75 = dma.done [#allocation7], 256
    $region37: #{tpu_custom_call.1} parent=1 // pred_fallthru
      _
    // Predicated region
    $region38: #{tpu_custom_call.1} parent=1 // pred_check
      _
    $region39: #{tpu_custom_call.1} parent=1 // pred_check_branch
      %77 = sbr.rel (0) target = $region41
    $region40: #{tpu_custom_call.1} parent=1 // pred_region
      %78 = dma.done [#allocation7], 512
    $region41: #{tpu_custom_call.1} parent=1 // pred_fallthru
      _
    // Predicated region
    $region42: #{tpu_custom_call.1} parent=1 // pred_check
      _
    $region43: #{tpu_custom_call.1} parent=1 // pred_check_branch
      %80 = sbr.rel (0) target = $region45
    $region44: #{tpu_custom_call.1} parent=1 // pred_region
      %81 = dma.done [#allocation10], 1024
    $region45: #{tpu_custom_call.1} parent=1 // pred_fallthru
      _
    %v82 = vld [vmem:[#allocation3] sm:$0xff]
    %v83 = vld [vmem:[#allocation3 + $0x8] sm:$0xff]
    %v84 = vld [vmem:[#allocation3 + $0x10] sm:$0xff]
    %v85 = vld [vmem:[#allocation3 + $0x18] sm:$0xff]
    %v86 = vld [vmem:[#allocation3 + $0x20] sm:$0xff]
    %v87 = vld [vmem:[#allocation3 + $0x28] sm:$0xff]
    %v88 = vld [vmem:[#allocation3 + $0x30] sm:$0xff]
    %v89 = vld [vmem:[#allocation3 + $0x38] sm:$0xff]
    %v90 = vld [vmem:[#allocation6] sm:$0xff]
    %v91 = vld [vmem:[#allocation6 + $0x8] sm:$0xff]
    %v92 = vld [vmem:[%s4] sm:$0x1]
    %v94 = vlaneseq
    %v95 = vshrl.u32 %v94, 7
    %v96 = vsub.s32 0, %v95
    %v97 = vrot.slane %v92, %v96
    %vm99 = vcmask 130048
    %v101 = vsel %vm99, %v82, 0
    %v104 = vsel %vm99, %v83, 0
    %v107 = vsel %vm99, %v84, 0
    %v110 = vsel %vm99, %v85, 0
    %v113 = vsel %vm99, %v86, 0
    %v116 = vsel %vm99, %v87, 0
    %v119 = vsel %vm99, %v88, 0
    %v122 = vsel %vm99, %v89, 0
    %124 = vmatprep.subr.mxu0 0.0
    %125 = vmatpush1.msra.mxu0 0.0
    %126 = vmatprep.subr.mxu0 0.0
    %127 = vmatpush1.msra.mxu0 0.0
    %128 = vmatprep.subr.mxu0 0.0
    %129 = vmatpush1.msra.mxu0 0.0
    %130 = vmatprep.subr.mxu0 0.0
    %131 = vmatpush1.msra.mxu0 0.0
    %132 = vmatprep.subr.mxu0 0.0
    %133 = vmatpush1.msra.mxu0 0.0
    %134 = vmatprep.subr.mxu0 0.0
    %135 = vmatpush1.msra.mxu0 0.0
    %136 = vmatprep.subr.mxu0 0.0
    %137 = vmatpush1.msra.mxu0 0.0
    %138 = vmatprep.subr.mxu0 0.0
    %139 = vmatpush1.msra.mxu0 0.0
    %140 = vmatprep.subr.mxu0 0.0
    %141 = vmatpush1.msra.mxu0 0.0
    %142 = vmatprep.subr.mxu0 0.0
    %143 = vmatpush1.msra.mxu0 0.0
    %144 = vmatprep.subr.mxu0 0.0
    %145 = vmatpush1.msra.mxu0 0.0
    %146 = vmatprep.subr.mxu0 0.0
    %147 = vmatpush1.msra.mxu0 0.0
    %148 = vmatprep.subr.mxu0 0.0
    %149 = vmatpush1.msra.mxu0 0.0
    %150 = vmatprep.subr.mxu0 0.0
    %151 = vmatpush1.msra.mxu0 0.0
    %152 = vmatprep.subr.mxu0 0.0
    %153 = vmatpush1.msra.mxu0 %v91
    %154 = vmatprep.subr.mxu0 0.0
    %155 = vmatpush1.msra.mxu0 %v90
    %156 = vmatprep.subr.mxu0 0.0
    %157 = vmatpush2.msra.mxu0 0.0
    %158 = vmatprep.subr.mxu0 0.0
    %159 = vmatpush2.msra.mxu0 0.0
    %160 = vmatprep.subr.mxu0 0.0
    %161 = vmatpush2.msra.mxu0 0.0
    %162 = vmatprep.subr.mxu0 0.0
    %163 = vmatpush2.msra.mxu0 0.0
    %164 = vmatprep.subr.mxu0 0.0
    %165 = vmatpush2.msra.mxu0 0.0
    %166 = vmatprep.subr.mxu0 0.0
    %167 = vmatpush2.msra.mxu0 0.0
    %168 = vmatprep.subr.mxu0 0.0
    %169 = vmatpush2.msra.mxu0 0.0
    %170 = vmatprep.subr.mxu0 0.0
    %171 = vmatpush2.msra.mxu0 0.0
    %172 = vmatprep.subr.mxu0 0.0
    %173 = vmatpush2.msra.mxu0 0.0
    %174 = vmatprep.subr.mxu0 0.0
    %175 = vmatpush2.msra.mxu0 0.0
    %176 = vmatprep.subr.mxu0 0.0
    %177 = vmatpush2.msra.mxu0 0.0
    %178 = vmatprep.subr.mxu0 0.0
    %179 = vmatpush2.msra.mxu0 0.0
    %180 = vmatprep.subr.mxu0 0.0
    %181 = vmatpush2.msra.mxu0 0.0
    %182 = vmatprep.subr.mxu0 0.0
    %183 = vmatpush2.msra.mxu0 0.0
    %184 = vmatprep.subr.mxu0 0.0
    %185 = vmatpush2.msra.mxu0 0.0
    %186 = vmatprep.subr.mxu0 0.0
    %187 = vmatpush2.msra.mxu0 0.0
    %188 = vmatprep.mubr.f32.mxu0 0.0
    %189 = vmatmul.mubr.f32.gmra.mxu0 %v101
    %v190 = vpop.f32.mrf.mxu0
    %v191 = vadd.f32 %v97, %v190
    %v192 = vpop.f32.mrf.mxu0
    %193 = vmatprep.mubr.f32.mxu0 0.0
    %194 = vmatmul.mubr.f32.gmra.mxu0 %v104
    %v195 = vpop.f32.mrf.mxu0
    %v196 = vadd.f32 %v97, %v195
    %v197 = vpop.f32.mrf.mxu0
    %198 = vmatprep.mubr.f32.mxu0 0.0
    %199 = vmatmul.mubr.f32.gmra.mxu0 %v107
    %v200 = vpop.f32.mrf.mxu0
    %v201 = vadd.f32 %v97, %v200
    %v202 = vpop.f32.mrf.mxu0
    %203 = vmatprep.mubr.f32.mxu0 0.0
    %204 = vmatmul.mubr.f32.gmra.mxu0 %v110
    %v205 = vpop.f32.mrf.mxu0
    %v206 = vadd.f32 %v97, %v205
    %v207 = vpop.f32.mrf.mxu0
    %208 = vmatprep.mubr.f32.mxu0 0.0
    %209 = vmatmul.mubr.f32.gmra.mxu0 %v113
    %v210 = vpop.f32.mrf.mxu0
    %v211 = vadd.f32 %v97, %v210
    %v212 = vpop.f32.mrf.mxu0
    %213 = vmatprep.mubr.f32.mxu0 0.0
    %214 = vmatmul.mubr.f32.gmra.mxu0 %v116
    %v215 = vpop.f32.mrf.mxu0
    %v216 = vadd.f32 %v97, %v215
    %v217 = vpop.f32.mrf.mxu0
    %218 = vmatprep.mubr.f32.mxu0 0.0
    %219 = vmatmul.mubr.f32.gmra.mxu0 %v119
    %v220 = vpop.f32.mrf.mxu0
    %v221 = vadd.f32 %v97, %v220
    %v222 = vpop.f32.mrf.mxu0
    %223 = vmatprep.mubr.f32.mxu0 0.0
    %224 = vmatmul.mubr.f32.gmra.mxu0 %v122
    %v225 = vpop.f32.mrf.mxu0
    %v226 = vadd.f32 %v97, %v225
    %v227 = vpop.f32.mrf.mxu0
    %228 = vdwg.mxu0
    %229 = vst [vmem:[#allocation2] sm:$0xff] %v191
    %230 = vst [vmem:[#allocation2 + $0x8] sm:$0xff] %v196
    %231 = vst [vmem:[#allocation2 + $0x10] sm:$0xff] %v201
    %232 = vst [vmem:[#allocation2 + $0x18] sm:$0xff] %v206
    %233 = vst [vmem:[#allocation2 + $0x20] sm:$0xff] %v211
    %234 = vst [vmem:[#allocation2 + $0x28] sm:$0xff] %v216
    %235 = vst [vmem:[#allocation2 + $0x30] sm:$0xff] %v221
    %236 = vst [vmem:[#allocation2 + $0x38] sm:$0xff] %v226
    %v237 = vld [vmem:[#allocation8] sm:$0xff]
    %v238 = vld [vmem:[#allocation8 + $0x8] sm:$0xff]
    %v239 = vld [vmem:[#allocation8 + $0x10] sm:$0xff]
    %v240 = vld [vmem:[#allocation8 + $0x18] sm:$0xff]
    %v241 = vld [vmem:[#allocation9] sm:$0xff]
    %v242 = vld [vmem:[#allocation9 + $0x8] sm:$0xff]
    %v243 = vld [vmem:[#allocation9 + $0x10] sm:$0xff]
    %v244 = vld [vmem:[#allocation9 + $0x18] sm:$0xff]
    %v245 = vld [vmem:[#allocation9 + $0x20] sm:$0xff]
    %v246 = vld [vmem:[#allocation9 + $0x28] sm:$0xff]
    %v247 = vld [vmem:[#allocation9 + $0x30] sm:$0xff]
    %v248 = vld [vmem:[#allocation9 + $0x38] sm:$0xff]
    %v249 = vld [vmem:[%s6] sm:$0x1]
    %v251 = vlaneseq
    %v252 = vshrl.u32 %v251, 7
    %v253 = vsub.s32 0, %v252
    %v254 = vrot.slane %v249, %v253
    %v256 = vld [vmem:[%s1] sm:$0xff]
    %vm257 = vcmp.gt.s32.totalorder %v256, 0
    %v258 = vld [vmem:[#allocation2] sm:$0xff]
    %vm259 = vcmask 261120
    %v261 = vsel %vm259, 0.0, 0
    %263 = vmatprep.subr.mxu0 0.0
    %264 = vmatpush1.msra.mxu0 0.0
    %265 = vmatprep.subr.mxu0 0.0
    %266 = vmatpush1.msra.mxu0 0.0
    %267 = vmatprep.subr.mxu0 0.0
    %268 = vmatpush1.msra.mxu0 0.0
    %269 = vmatprep.subr.mxu0 0.0
    %270 = vmatpush1.msra.mxu0 0.0
    %271 = vmatprep.subr.mxu0 0.0
    %272 = vmatpush1.msra.mxu0 0.0
    %273 = vmatprep.subr.mxu0 0.0
    %274 = vmatpush1.msra.mxu0 0.0
    %275 = vmatprep.subr.mxu0 0.0
    %276 = vmatpush1.msra.mxu0 0.0
    %277 = vmatprep.subr.mxu0 0.0
    %278 = vmatpush1.msra.mxu0 0.0
    %279 = vmatprep.subr.mxu0 0.0
    %280 = vmatpush1.msra.mxu0 0.0
    %281 = vmatprep.subr.mxu0 0.0
    %282 = vmatpush1.msra.mxu0 0.0
    %283 = vmatprep.subr.mxu0 0.0
    %284 = vmatpush1.msra.mxu0 0.0
    %285 = vmatprep.subr.mxu0 0.0
    %286 = vmatpush1.msra.mxu0 0.0
    %287 = vmatprep.subr.mxu0 0.0
    %288 = vmatpush1.msra.mxu0 %v240
    %289 = vmatprep.subr.mxu0 0.0
    %290 = vmatpush1.msra.mxu0 %v239
    %291 = vmatprep.subr.mxu0 0.0
    %292 = vmatpush1.msra.mxu0 %v238
    %293 = vmatprep.subr.mxu0 0.0
    %294 = vmatpush1.msra.mxu0 %v237
    %295 = vmatprep.subr.mxu0 0.0
    %296 = vmatpush2.msra.mxu0 0.0
    %297 = vmatprep.subr.mxu0 0.0
    %298 = vmatpush2.msra.mxu0 0.0
    %299 = vmatprep.subr.mxu0 0.0
    %300 = vmatpush2.msra.mxu0 0.0
    %301 = vmatprep.subr.mxu0 0.0
    %302 = vmatpush2.msra.mxu0 0.0
    %303 = vmatprep.subr.mxu0 0.0
    %304 = vmatpush2.msra.mxu0 0.0
    %305 = vmatprep.subr.mxu0 0.0
    %306 = vmatpush2.msra.mxu0 0.0
    %307 = vmatprep.subr.mxu0 0.0
    %308 = vmatpush2.msra.mxu0 0.0
    %309 = vmatprep.subr.mxu0 0.0
    %310 = vmatpush2.msra.mxu0 0.0
    %311 = vmatprep.subr.mxu0 0.0
    %312 = vmatpush2.msra.mxu0 0.0
    %313 = vmatprep.subr.mxu0 0.0
    %314 = vmatpush2.msra.mxu0 0.0
    %315 = vmatprep.subr.mxu0 0.0
    %316 = vmatpush2.msra.mxu0 0.0
    %317 = vmatprep.subr.mxu0 0.0
    %318 = vmatpush2.msra.mxu0 0.0
    %319 = vmatprep.subr.mxu0 0.0
    %320 = vmatpush2.msra.mxu0 0.0
    %321 = vmatprep.subr.mxu0 0.0
    %322 = vmatpush2.msra.mxu0 0.0
    %323 = vmatprep.subr.mxu0 0.0
    %324 = vmatpush2.msra.mxu0 0.0
    %325 = vmatprep.subr.mxu0 0.0
    %326 = vmatpush2.msra.mxu0 0.0
    %327 = vmatprep.mubr.f32.mxu0 0.0
    %328 = vmatmul.mubr.f32.gmra.mxu0 %v261
    %v329 = vpop.f32.mrf.mxu0
    %v330 = vadd.f32 0.0, %v329
    %v331 = vpop.f32.mrf.mxu0
    %332 = vdwg.mxu0
    %v333 = vadd.f32 %v258, %v330
    %v334 = vxor.u32 %v333, 2147483648
    %v335 = vmul.f32 %v334, 1.442695
    %v336 = vpow.pop %v335
    %v337 = vadd.f32 %v336, 1.0
    %v338 = vrcp.pop %v337
    %v339 = vmul.f32 1.0, %v338
    %v340 = vtanh.pop %v333
    %v341 = vmul.f32 %v339, 0.0
    %343 = vrot.lane.b32.xlu0 %v340, 64
    %v344 = vpop.permute.xlu0 %343
    %v346 = vmul.f32 %v339, %v344
    %348 = vrot.lane.b32.xlu0 %v346, 32
    %v349 = vpop.permute.xlu0 %348
    %v351 = vadd.f32 %v341, %v349
    %v352 = vtanh.pop %v351
    %354 = vrot.lane.b32.xlu0 %v352, 64
    %v355 = vpop.permute.xlu0 %354
    %v357 = vmul.f32 %v339, %v355
    %v358 = vsel %vm257, 1, 0
    %359 = vset.pattern.permute.xlu0 0
    %360 = vperm.xlu0 %359, %v358
    %v361 = vpop.permute.xlu0 %360
    %vm362 = vcmp.eq.s32.totalorder %v361, 1
    %v363 = vsel %vm362, %v357, 0.0
    %v364 = vsel %vm362, %v351, 0.0
    %366 = vrot.lane.b32.xlu0 %v363, 32
    %v367 = vpop.permute.xlu0 %366
    %v369 = vsel %vm259, %v367, 0.0
    %vm370 = vcmask 523264
    %v372 = vsel %vm370, %v369, 0
    %374 = vmatprep.subr.mxu0 0.0
    %375 = vmatpush1.msra.mxu0 0.0
    %376 = vmatprep.subr.mxu0 0.0
    %377 = vmatpush1.msra.mxu0 0.0
    %378 = vmatprep.subr.mxu0 0.0
    %379 = vmatpush1.msra.mxu0 0.0
    %380 = vmatprep.subr.mxu0 0.0
    %381 = vmatpush1.msra.mxu0 0.0
    %382 = vmatprep.subr.mxu0 0.0
    %383 = vmatpush1.msra.mxu0 0.0
    %384 = vmatprep.subr.mxu0 0.0
    %385 = vmatpush1.msra.mxu0 0.0
    %386 = vmatprep.subr.mxu0 0.0
    %387 = vmatpush1.msra.mxu0 0.0
    %388 = vmatprep.subr.mxu0 0.0
    %389 = vmatpush1.msra.mxu0 0.0
    %390 = vmatprep.subr.mxu0 0.0
    %391 = vmatpush1.msra.mxu0 %v248
    %392 = vmatprep.subr.mxu0 0.0
    %393 = vmatpush1.msra.mxu0 %v247
    %394 = vmatprep.subr.mxu0 0.0
    %395 = vmatpush1.msra.mxu0 %v246
    %396 = vmatprep.subr.mxu0 0.0
    %397 = vmatpush1.msra.mxu0 %v245
    %398 = vmatprep.subr.mxu0 0.0
    %399 = vmatpush1.msra.mxu0 %v244
    %400 = vmatprep.subr.mxu0 0.0
    %401 = vmatpush1.msra.mxu0 %v243
    %402 = vmatprep.subr.mxu0 0.0
    %403 = vmatpush1.msra.mxu0 %v242
    %404 = vmatprep.subr.mxu0 0.0
    %405 = vmatpush1.msra.mxu0 %v241
    %406 = vmatprep.subr.mxu0 0.0
    %407 = vmatpush2.msra.mxu0 0.0
    %408 = vmatprep.subr.mxu0 0.0
    %409 = vmatpush2.msra.mxu0 0.0
    %410 = vmatprep.subr.mxu0 0.0
    %411 = vmatpush2.msra.mxu0 0.0
    %412 = vmatprep.subr.mxu0 0.0
    %413 = vmatpush2.msra.mxu0 0.0
    %414 = vmatprep.subr.mxu0 0.0
    %415 = vmatpush2.msra.mxu0 0.0
    %416 = vmatprep.subr.mxu0 0.0
    %417 = vmatpush2.msra.mxu0 0.0
    %418 = vmatprep.subr.mxu0 0.0
    %419 = vmatpush2.msra.mxu0 0.0
    %420 = vmatprep.subr.mxu0 0.0
    %421 = vmatpush2.msra.mxu0 0.0
    %422 = vmatprep.subr.mxu0 0.0
    %423 = vmatpush2.msra.mxu0 0.0
    %424 = vmatprep.subr.mxu0 0.0
    %425 = vmatpush2.msra.mxu0 0.0
    %426 = vmatprep.subr.mxu0 0.0
    %427 = vmatpush2.msra.mxu0 0.0
    %428 = vmatprep.subr.mxu0 0.0
    %429 = vmatpush2.msra.mxu0 0.0
    %430 = vmatprep.subr.mxu0 0.0
    %431 = vmatpush2.msra.mxu0 0.0
    %432 = vmatprep.subr.mxu0 0.0
    %433 = vmatpush2.msra.mxu0 0.0
    %434 = vmatprep.subr.mxu0 0.0
    %435 = vmatpush2.msra.mxu0 0.0
    %436 = vmatprep.subr.mxu0 0.0
    %437 = vmatpush2.msra.mxu0 0.0
    %438 = vmatprep.mubr.f32.mxu0 0.0
    %439 = vmatmul.mubr.f32.gmra.mxu0 %v372
    %v440 = vpop.f32.mrf.mxu0
    %v441 = vadd.f32 %v254, %v440
    %v442 = vpop.f32.mrf.mxu0
    %443 = vdwg.mxu0
    %v444 = vxor.u32 %v441, 2147483648
    %v445 = vmul.f32 %v444, 1.442695
    %v446 = vpow.pop %v445
    %v447 = vadd.f32 %v446, 1.0
    %v448 = vrcp.pop %v447
    %v449 = vmul.f32 1.0, %v448
    %v450 = vtanh.pop %v441
    %v451 = vmul.f32 %v449, 0.0
    %453 = vrot.lane.b32.xlu0 %v450, 64
    %v454 = vpop.permute.xlu0 %453
    %v456 = vmul.f32 %v449, %v454
    %458 = vrot.lane.b32.xlu0 %v456, 32
    %v459 = vpop.permute.xlu0 %458
    %v461 = vadd.f32 %v451, %v459
    %v462 = vtanh.pop %v461
    %464 = vrot.lane.b32.xlu0 %v462, 64
    %v465 = vpop.permute.xlu0 %464
    %v467 = vmul.f32 %v449, %v465
    %v468 = vsel %vm362, %v467, 0.0
    %v469 = vsel %vm362, %v461, 0.0
    %vm470 = vcmp.gt.s32.totalorder %v256, 1
    %s471 = scalar_lea.vmem [#allocation2], 8
    %v472 = vld [vmem:[%s471] sm:$0xff]
    %v473 = vsel %vm259, %v367, 0
    %475 = vmatprep.subr.mxu0 0.0
    %476 = vmatpush1.msra.mxu0 0.0
    %477 = vmatprep.subr.mxu0 0.0
    %478 = vmatpush1.msra.mxu0 0.0
    %479 = vmatprep.subr.mxu0 0.0
    %480 = vmatpush1.msra.mxu0 0.0
    %481 = vmatprep.subr.mxu0 0.0
    %482 = vmatpush1.msra.mxu0 0.0
    %483 = vmatprep.subr.mxu0 0.0
    %484 = vmatpush1.msra.mxu0 0.0
    %485 = vmatprep.subr.mxu0 0.0
    %486 = vmatpush1.msra.mxu0 0.0
    %487 = vmatprep.subr.mxu0 0.0
    %488 = vmatpush1.msra.mxu0 0.0
    %489 = vmatprep.subr.mxu0 0.0
    %490 = vmatpush1.msra.mxu0 0.0
    %491 = vmatprep.subr.mxu0 0.0
    %492 = vmatpush1.msra.mxu0 0.0
    %493 = vmatprep.subr.mxu0 0.0
    %494 = vmatpush1.msra.mxu0 0.0
    %495 = vmatprep.subr.mxu0 0.0
    %496 = vmatpush1.msra.mxu0 0.0
    %497 = vmatprep.subr.mxu0 0.0
    %498 = vmatpush1.msra.mxu0 0.0
    %499 = vmatprep.subr.mxu0 0.0
    %500 = vmatpush1.msra.mxu0 %v240
    %501 = vmatprep.subr.mxu0 0.0
    %502 = vmatpush1.msra.mxu0 %v239
    %503 = vmatprep.subr.mxu0 0.0
    %504 = vmatpush1.msra.mxu0 %v238
    %505 = vmatprep.subr.mxu0 0.0
    %506 = vmatpush1.msra.mxu0 %v237
    %507 = vmatprep.subr.mxu0 0.0
    %508 = vmatpush2.msra.mxu0 0.0
    %509 = vmatprep.subr.mxu0 0.0
    %510 = vmatpush2.msra.mxu0 0.0
    %511 = vmatprep.subr.mxu0 0.0
    %512 = vmatpush2.msra.mxu0 0.0
    %513 = vmatprep.subr.mxu0 0.0
    %514 = vmatpush2.msra.mxu0 0.0
    %515 = vmatprep.subr.mxu0 0.0
    %516 = vmatpush2.msra.mxu0 0.0
    %517 = vmatprep.subr.mxu0 0.0
    %518 = vmatpush2.msra.mxu0 0.0
    %519 = vmatprep.subr.mxu0 0.0
    %520 = vmatpush2.msra.mxu0 0.0
    %521 = vmatprep.subr.mxu0 0.0
    %522 = vmatpush2.msra.mxu0 0.0
    %523 = vmatprep.subr.mxu0 0.0
    %524 = vmatpush2.msra.mxu0 0.0
    %525 = vmatprep.subr.mxu0 0.0
    %526 = vmatpush2.msra.mxu0 0.0
    %527 = vmatprep.subr.mxu0 0.0
    %528 = vmatpush2.msra.mxu0 0.0
    %529 = vmatprep.subr.mxu0 0.0
    %530 = vmatpush2.msra.mxu0 0.0
    %531 = vmatprep.subr.mxu0 0.0
    %532 = vmatpush2.msra.mxu0 0.0
    %533 = vmatprep.subr.mxu0 0.0
    %534 = vmatpush2.msra.mxu0 0.0
    %535 = vmatprep.subr.mxu0 0.0
    %536 = vmatpush2.msra.mxu0 0.0
    %537 = vmatprep.subr.mxu0 0.0
    %538 = vmatpush2.msra.mxu0 0.0
    %539 = vmatprep.mubr.f32.mxu0 0.0
    %540 = vmatmul.mubr.f32.gmra.mxu0 %v473
    %v541 = vpop.f32.mrf.mxu0
    %v542 = vadd.f32 0.0, %v541
    %v543 = vpop.f32.mrf.mxu0
    %544 = vdwg.mxu0
    %v545 = vadd.f32 %v472, %v542
    %v546 = vxor.u32 %v545, 2147483648
    %v547 = vmul.f32 %v546, 1.442695
    %v548 = vpow.pop %v547
    %v549 = vadd.f32 %v548, 1.0
    %v550 = vrcp.pop %v549
    %v551 = vmul.f32 1.0, %v550
    %v552 = vtanh.pop %v545
    %v553 = vmul.f32 %v551, %v364
    %555 = vrot.lane.b32.xlu0 %v552, 64
    %v556 = vpop.permute.xlu0 %555
    %v558 = vmul.f32 %v551, %v556
    %560 = vrot.lane.b32.xlu0 %v558, 32
    %v561 = vpop.permute.xlu0 %560
    %v563 = vadd.f32 %v553, %v561
    %v564 = vtanh.pop %v563
    %566 = vrot.lane.b32.xlu0 %v564, 64
    %v567 = vpop.permute.xlu0 %566
    %v569 = vmul.f32 %v551, %v567
    %v570 = vsel %vm470, 1, 0
    %571 = vset.pattern.permute.xlu0 0
    %572 = vperm.xlu0 %571, %v570
    %v573 = vpop.permute.xlu0 %572
    %vm574 = vcmp.eq.s32.totalorder %v573, 1
    %v575 = vsel %vm574, %v569, %v363
    %v576 = vsel %vm574, %v563, %v364
    %578 = vrot.lane.b32.xlu0 %v575, 32
    %v579 = vpop.permute.xlu0 %578
    %582 = vrot.lane.b32.xlu0 %v468, 64
    %v583 = vpop.permute.xlu0 %582
    %v585 = vsel %vm259, %v579, %v583
    %v587 = vsel %vm370, %v585, 0
    %589 = vmatprep.subr.mxu0 0.0
    %590 = vmatpush1.msra.mxu0 0.0
    %591 = vmatprep.subr.mxu0 0.0
    %592 = vmatpush1.msra.mxu0 0.0
    %593 = vmatprep.subr.mxu0 0.0
    %594 = vmatpush1.msra.mxu0 0.0
    %595 = vmatprep.subr.mxu0 0.0
    %596 = vmatpush1.msra.mxu0 0.0
    %597 = vmatprep.subr.mxu0 0.0
    %598 = vmatpush1.msra.mxu0 0.0
    %599 = vmatprep.subr.mxu0 0.0
    %600 = vmatpush1.msra.mxu0 0.0
    %601 = vmatprep.subr.mxu0 0.0
    %602 = vmatpush1.msra.mxu0 0.0
    %603 = vmatprep.subr.mxu0 0.0
    %604 = vmatpush1.msra.mxu0 0.0
    %605 = vmatprep.subr.mxu0 0.0
    %606 = vmatpush1.msra.mxu0 %v248
    %607 = vmatprep.subr.mxu0 0.0
    %608 = vmatpush1.msra.mxu0 %v247
    %609 = vmatprep.subr.mxu0 0.0
    %610 = vmatpush1.msra.mxu0 %v246
    %611 = vmatprep.subr.mxu0 0.0
    %612 = vmatpush1.msra.mxu0 %v245
    %613 = vmatprep.subr.mxu0 0.0
    %614 = vmatpush1.msra.mxu0 %v244
    %615 = vmatprep.subr.mxu0 0.0
    %616 = vmatpush1.msra.mxu0 %v243
    %617 = vmatprep.subr.mxu0 0.0
    %618 = vmatpush1.msra.mxu0 %v242
    %619 = vmatprep.subr.mxu0 0.0
    %620 = vmatpush1.msra.mxu0 %v241
    %621 = vmatprep.subr.mxu0 0.0
    %622 = vmatpush2.msra.mxu0 0.0
    %623 = vmatprep.subr.mxu0 0.0
    %624 = vmatpush2.msra.mxu0 0.0
    %625 = vmatprep.subr.mxu0 0.0
    %626 = vmatpush2.msra.mxu0 0.0
    %627 = vmatprep.subr.mxu0 0.0
    %628 = vmatpush2.msra.mxu0 0.0
    %629 = vmatprep.subr.mxu0 0.0
    %630 = vmatpush2.msra.mxu0 0.0
    %631 = vmatprep.subr.mxu0 0.0
    %632 = vmatpush2.msra.mxu0 0.0
    %633 = vmatprep.subr.mxu0 0.0
    %634 = vmatpush2.msra.mxu0 0.0
    %635 = vmatprep.subr.mxu0 0.0
    %636 = vmatpush2.msra.mxu0 0.0
    %637 = vmatprep.subr.mxu0 0.0
    %638 = vmatpush2.msra.mxu0 0.0
    %639 = vmatprep.subr.mxu0 0.0
    %640 = vmatpush2.msra.mxu0 0.0
    %641 = vmatprep.subr.mxu0 0.0
    %642 = vmatpush2.msra.mxu0 0.0
    %643 = vmatprep.subr.mxu0 0.0
    %644 = vmatpush2.msra.mxu0 0.0
    %645 = vmatprep.subr.mxu0 0.0
    %646 = vmatpush2.msra.mxu0 0.0
    %647 = vmatprep.subr.mxu0 0.0
    %648 = vmatpush2.msra.mxu0 0.0
    %649 = vmatprep.subr.mxu0 0.0
    %650 = vmatpush2.msra.mxu0 0.0
    %651 = vmatprep.subr.mxu0 0.0
    %652 = vmatpush2.msra.mxu0 0.0
    %653 = vmatprep.mubr.f32.mxu0 0.0
    %654 = vmatmul.mubr.f32.gmra.mxu0 %v587
    %v655 = vpop.f32.mrf.mxu0
    %v656 = vadd.f32 %v254, %v655
    %v657 = vpop.f32.mrf.mxu0
    %658 = vdwg.mxu0
    %v659 = vxor.u32 %v656, 2147483648
    %v660 = vmul.f32 %v659, 1.442695
    %v661 = vpow.pop %v660
    %v662 = vadd.f32 %v661, 1.0
    %v663 = vrcp.pop %v662
    %v664 = vmul.f32 1.0, %v663
    %v665 = vtanh.pop %v656
    %v666 = vmul.f32 %v664, %v469
    %668 = vrot.lane.b32.xlu0 %v665, 64
    %v669 = vpop.permute.xlu0 %668
    %v671 = vmul.f32 %v664, %v669
    %673 = vrot.lane.b32.xlu0 %v671, 32
    %v674 = vpop.permute.xlu0 %673
    %v676 = vadd.f32 %v666, %v674
    %v677 = vtanh.pop %v676
    %679 = vrot.lane.b32.xlu0 %v677, 64
    %v680 = vpop.permute.xlu0 %679
    %v682 = vmul.f32 %v664, %v680
    %v683 = vsel %vm574, %v682, %v468
    %v684 = vsel %vm574, %v676, %v469
    %vm685 = vcmp.gt.s32.totalorder %v256, 2
    %s686 = scalar_lea.vmem [#allocation2], 16
    %v687 = vld [vmem:[%s686] sm:$0xff]
    %v688 = vsel %vm259, %v579, 0
    %690 = vmatprep.subr.mxu0 0.0
    %691 = vmatpush1.msra.mxu0 0.0
    %692 = vmatprep.subr.mxu0 0.0
    %693 = vmatpush1.msra.mxu0 0.0
    %694 = vmatprep.subr.mxu0 0.0
    %695 = vmatpush1.msra.mxu0 0.0
    %696 = vmatprep.subr.mxu0 0.0
    %697 = vmatpush1.msra.mxu0 0.0
    %698 = vmatprep.subr.mxu0 0.0
    %699 = vmatpush1.msra.mxu0 0.0
    %700 = vmatprep.subr.mxu0 0.0
    %701 = vmatpush1.msra.mxu0 0.0
    %702 = vmatprep.subr.mxu0 0.0
    %703 = vmatpush1.msra.mxu0 0.0
    %704 = vmatprep.subr.mxu0 0.0
    %705 = vmatpush1.msra.mxu0 0.0
    %706 = vmatprep.subr.mxu0 0.0
    %707 = vmatpush1.msra.mxu0 0.0
    %708 = vmatprep.subr.mxu0 0.0
    %709 = vmatpush1.msra.mxu0 0.0
    %710 = vmatprep.subr.mxu0 0.0
    %711 = vmatpush1.msra.mxu0 0.0
    %712 = vmatprep.subr.mxu0 0.0
    %713 = vmatpush1.msra.mxu0 0.0
    %714 = vmatprep.subr.mxu0 0.0
    %715 = vmatpush1.msra.mxu0 %v240
    %716 = vmatprep.subr.mxu0 0.0
    %717 = vmatpush1.msra.mxu0 %v239
    %718 = vmatprep.subr.mxu0 0.0
    %719 = vmatpush1.msra.mxu0 %v238
    %720 = vmatprep.subr.mxu0 0.0
    %721 = vmatpush1.msra.mxu0 %v237
    %722 = vmatprep.subr.mxu0 0.0
    %723 = vmatpush2.msra.mxu0 0.0
    %724 = vmatprep.subr.mxu0 0.0
    %725 = vmatpush2.msra.mxu0 0.0
    %726 = vmatprep.subr.mxu0 0.0
    %727 = vmatpush2.msra.mxu0 0.0
    %728 = vmatprep.subr.mxu0 0.0
    %729 = vmatpush2.msra.mxu0 0.0
    %730 = vmatprep.subr.mxu0 0.0
    %731 = vmatpush2.msra.mxu0 0.0
    %732 = vmatprep.subr.mxu0 0.0
    %733 = vmatpush2.msra.mxu0 0.0
    %734 = vmatprep.subr.mxu0 0.0
    %735 = vmatpush2.msra.mxu0 0.0
    %736 = vmatprep.subr.mxu0 0.0
    %737 = vmatpush2.msra.mxu0 0.0
    %738 = vmatprep.subr.mxu0 0.0
    %739 = vmatpush2.msra.mxu0 0.0
    %740 = vmatprep.subr.mxu0 0.0
    %741 = vmatpush2.msra.mxu0 0.0
    %742 = vmatprep.subr.mxu0 0.0
    %743 = vmatpush2.msra.mxu0 0.0
    %744 = vmatprep.subr.mxu0 0.0
    %745 = vmatpush2.msra.mxu0 0.0
    %746 = vmatprep.subr.mxu0 0.0
    %747 = vmatpush2.msra.mxu0 0.0
    %748 = vmatprep.subr.mxu0 0.0
    %749 = vmatpush2.msra.mxu0 0.0
    %750 = vmatprep.subr.mxu0 0.0
    %751 = vmatpush2.msra.mxu0 0.0
    %752 = vmatprep.subr.mxu0 0.0
    %753 = vmatpush2.msra.mxu0 0.0
    %754 = vmatprep.mubr.f32.mxu0 0.0
    %755 = vmatmul.mubr.f32.gmra.mxu0 %v688
    %v756 = vpop.f32.mrf.mxu0
    %v757 = vadd.f32 0.0, %v756
    %v758 = vpop.f32.mrf.mxu0
    %759 = vdwg.mxu0
    %v760 = vadd.f32 %v687, %v757
    %v761 = vxor.u32 %v760, 2147483648
    %v762 = vmul.f32 %v761, 1.442695
    %v763 = vpow.pop %v762
    %v764 = vadd.f32 %v763, 1.0
    %v765 = vrcp.pop %v764
    %v766 = vmul.f32 1.0, %v765
    %v767 = vtanh.pop %v760
    %v768 = vmul.f32 %v766, %v576
    %770 = vrot.lane.b32.xlu0 %v767, 64
    %v771 = vpop.permute.xlu0 %770
    %v773 = vmul.f32 %v766, %v771
    %775 = vrot.lane.b32.xlu0 %v773, 32
    %v776 = vpop.permute.xlu0 %775
    %v778 = vadd.f32 %v768, %v776
    %v779 = vtanh.pop %v778
    %781 = vrot.lane.b32.xlu0 %v779, 64
    %v782 = vpop.permute.xlu0 %781
    %v784 = vmul.f32 %v766, %v782
    %v785 = vsel %vm685, 1, 0
    %786 = vset.pattern.permute.xlu0 0
    %787 = vperm.xlu0 %786, %v785
    %v788 = vpop.permute.xlu0 %787
    %vm789 = vcmp.eq.s32.totalorder %v788, 1
    %v790 = vsel %vm789, %v784, %v575
    %v791 = vsel %vm789, %v778, %v576
    %793 = vrot.lane.b32.xlu0 %v790, 32
    %v794 = vpop.permute.xlu0 %793
    %797 = vrot.lane.b32.xlu0 %v683, 64
    %v798 = vpop.permute.xlu0 %797
    %v800 = vsel %vm259, %v794, %v798
    %v802 = vsel %vm370, %v800, 0
    %804 = vmatprep.subr.mxu0 0.0
    %805 = vmatpush1.msra.mxu0 0.0
    %806 = vmatprep.subr.mxu0 0.0
    %807 = vmatpush1.msra.mxu0 0.0
    %808 = vmatprep.subr.mxu0 0.0
    %809 = vmatpush1.msra.mxu0 0.0
    %810 = vmatprep.subr.mxu0 0.0
    %811 = vmatpush1.msra.mxu0 0.0
    %812 = vmatprep.subr.mxu0 0.0
    %813 = vmatpush1.msra.mxu0 0.0
    %814 = vmatprep.subr.mxu0 0.0
    %815 = vmatpush1.msra.mxu0 0.0
    %816 = vmatprep.subr.mxu0 0.0
    %817 = vmatpush1.msra.mxu0 0.0
    %818 = vmatprep.subr.mxu0 0.0
    %819 = vmatpush1.msra.mxu0 0.0
    %820 = vmatprep.subr.mxu0 0.0
    %821 = vmatpush1.msra.mxu0 %v248
    %822 = vmatprep.subr.mxu0 0.0
    %823 = vmatpush1.msra.mxu0 %v247
    %824 = vmatprep.subr.mxu0 0.0
    %825 = vmatpush1.msra.mxu0 %v246
    %826 = vmatprep.subr.mxu0 0.0
    %827 = vmatpush1.msra.mxu0 %v245
    %828 = vmatprep.subr.mxu0 0.0
    %829 = vmatpush1.msra.mxu0 %v244
    %830 = vmatprep.subr.mxu0 0.0
    %831 = vmatpush1.msra.mxu0 %v243
    %832 = vmatprep.subr.mxu0 0.0
    %833 = vmatpush1.msra.mxu0 %v242
    %834 = vmatprep.subr.mxu0 0.0
    %835 = vmatpush1.msra.mxu0 %v241
    %836 = vmatprep.subr.mxu0 0.0
    %837 = vmatpush2.msra.mxu0 0.0
    %838 = vmatprep.subr.mxu0 0.0
    %839 = vmatpush2.msra.mxu0 0.0
    %840 = vmatprep.subr.mxu0 0.0
    %841 = vmatpush2.msra.mxu0 0.0
    %842 = vmatprep.subr.mxu0 0.0
    %843 = vmatpush2.msra.mxu0 0.0
    %844 = vmatprep.subr.mxu0 0.0
    %845 = vmatpush2.msra.mxu0 0.0
    %846 = vmatprep.subr.mxu0 0.0
    %847 = vmatpush2.msra.mxu0 0.0
    %848 = vmatprep.subr.mxu0 0.0
    %849 = vmatpush2.msra.mxu0 0.0
    %850 = vmatprep.subr.mxu0 0.0
    %851 = vmatpush2.msra.mxu0 0.0
    %852 = vmatprep.subr.mxu0 0.0
    %853 = vmatpush2.msra.mxu0 0.0
    %854 = vmatprep.subr.mxu0 0.0
    %855 = vmatpush2.msra.mxu0 0.0
    %856 = vmatprep.subr.mxu0 0.0
    %857 = vmatpush2.msra.mxu0 0.0
    %858 = vmatprep.subr.mxu0 0.0
    %859 = vmatpush2.msra.mxu0 0.0
    %860 = vmatprep.subr.mxu0 0.0
    %861 = vmatpush2.msra.mxu0 0.0
    %862 = vmatprep.subr.mxu0 0.0
    %863 = vmatpush2.msra.mxu0 0.0
    %864 = vmatprep.subr.mxu0 0.0
    %865 = vmatpush2.msra.mxu0 0.0
    %866 = vmatprep.subr.mxu0 0.0
    %867 = vmatpush2.msra.mxu0 0.0
    %868 = vmatprep.mubr.f32.mxu0 0.0
    %869 = vmatmul.mubr.f32.gmra.mxu0 %v802
    %v870 = vpop.f32.mrf.mxu0
    %v871 = vadd.f32 %v254, %v870
    %v872 = vpop.f32.mrf.mxu0
    %873 = vdwg.mxu0
    %v874 = vxor.u32 %v871, 2147483648
    %v875 = vmul.f32 %v874, 1.442695
    %v876 = vpow.pop %v875
    %v877 = vadd.f32 %v876, 1.0
    %v878 = vrcp.pop %v877
    %v879 = vmul.f32 1.0, %v878
    %v880 = vtanh.pop %v871
    %v881 = vmul.f32 %v879, %v684
    %883 = vrot.lane.b32.xlu0 %v880, 64
    %v884 = vpop.permute.xlu0 %883
    %v886 = vmul.f32 %v879, %v884
    %888 = vrot.lane.b32.xlu0 %v886, 32
    %v889 = vpop.permute.xlu0 %888
    %v891 = vadd.f32 %v881, %v889
    %v892 = vtanh.pop %v891
    %894 = vrot.lane.b32.xlu0 %v892, 64
    %v895 = vpop.permute.xlu0 %894
    %v897 = vmul.f32 %v879, %v895
    %v898 = vsel %vm789, %v897, %v683
    %v899 = vsel %vm789, %v891, %v684
    %vm900 = vcmp.gt.s32.totalorder %v256, 3
    %s901 = scalar_lea.vmem [#allocation2], 24
    %v902 = vld [vmem:[%s901] sm:$0xff]
    %v903 = vsel %vm259, %v794, 0
    %905 = vmatprep.subr.mxu0 0.0
    %906 = vmatpush1.msra.mxu0 0.0
    %907 = vmatprep.subr.mxu0 0.0
    %908 = vmatpush1.msra.mxu0 0.0
    %909 = vmatprep.subr.mxu0 0.0
    %910 = vmatpush1.msra.mxu0 0.0
    %911 = vmatprep.subr.mxu0 0.0
    %912 = vmatpush1.msra.mxu0 0.0
    %913 = vmatprep.subr.mxu0 0.0
    %914 = vmatpush1.msra.mxu0 0.0
    %915 = vmatprep.subr.mxu0 0.0
    %916 = vmatpush1.msra.mxu0 0.0
    %917 = vmatprep.subr.mxu0 0.0
    %918 = vmatpush1.msra.mxu0 0.0
    %919 = vmatprep.subr.mxu0 0.0
    %920 = vmatpush1.msra.mxu0 0.0
    %921 = vmatprep.subr.mxu0 0.0
    %922 = vmatpush1.msra.mxu0 0.0
    %923 = vmatprep.subr.mxu0 0.0
    %924 = vmatpush1.msra.mxu0 0.0
    %925 = vmatprep.subr.mxu0 0.0
    %926 = vmatpush1.msra.mxu0 0.0
    %927 = vmatprep.subr.mxu0 0.0
    %928 = vmatpush1.msra.mxu0 0.0
    %929 = vmatprep.subr.mxu0 0.0
    %930 = vmatpush1.msra.mxu0 %v240
    %931 = vmatprep.subr.mxu0 0.0
    %932 = vmatpush1.msra.mxu0 %v239
    %933 = vmatprep.subr.mxu0 0.0
    %934 = vmatpush1.msra.mxu0 %v238
    %935 = vmatprep.subr.mxu0 0.0
    %936 = vmatpush1.msra.mxu0 %v237
    %937 = vmatprep.subr.mxu0 0.0
    %938 = vmatpush2.msra.mxu0 0.0
    %939 = vmatprep.subr.mxu0 0.0
    %940 = vmatpush2.msra.mxu0 0.0
    %941 = vmatprep.subr.mxu0 0.0
    %942 = vmatpush2.msra.mxu0 0.0
    %943 = vmatprep.subr.mxu0 0.0
    %944 = vmatpush2.msra.mxu0 0.0
    %945 = vmatprep.subr.mxu0 0.0
    %946 = vmatpush2.msra.mxu0 0.0
    %947 = vmatprep.subr.mxu0 0.0
    %948 = vmatpush2.msra.mxu0 0.0
    %949 = vmatprep.subr.mxu0 0.0
    %950 = vmatpush2.msra.mxu0 0.0
    %951 = vmatprep.subr.mxu0 0.0
    %952 = vmatpush2.msra.mxu0 0.0
    %953 = vmatprep.subr.mxu0 0.0
    %954 = vmatpush2.msra.mxu0 0.0
    %955 = vmatprep.subr.mxu0 0.0
    %956 = vmatpush2.msra.mxu0 0.0
    %957 = vmatprep.subr.mxu0 0.0
    %958 = vmatpush2.msra.mxu0 0.0
    %959 = vmatprep.subr.mxu0 0.0
    %960 = vmatpush2.msra.mxu0 0.0
    %961 = vmatprep.subr.mxu0 0.0
    %962 = vmatpush2.msra.mxu0 0.0
    %963 = vmatprep.subr.mxu0 0.0
    %964 = vmatpush2.msra.mxu0 0.0
    %965 = vmatprep.subr.mxu0 0.0
    %966 = vmatpush2.msra.mxu0 0.0
    %967 = vmatprep.subr.mxu0 0.0
    %968 = vmatpush2.msra.mxu0 0.0
    %969 = vmatprep.mubr.f32.mxu0 0.0
    %970 = vmatmul.mubr.f32.gmra.mxu0 %v903
    %v971 = vpop.f32.mrf.mxu0
    %v972 = vadd.f32 0.0, %v971
    %v973 = vpop.f32.mrf.mxu0
    %974 = vdwg.mxu0
    %v975 = vadd.f32 %v902, %v972
    %v976 = vxor.u32 %v975, 2147483648
    %v977 = vmul.f32 %v976, 1.442695
    %v978 = vpow.pop %v977
    %v979 = vadd.f32 %v978, 1.0
    %v980 = vrcp.pop %v979
    %v981 = vmul.f32 1.0, %v980
    %v982 = vtanh.pop %v975
    %v983 = vmul.f32 %v981, %v791
    %985 = vrot.lane.b32.xlu0 %v982, 64
    %v986 = vpop.permute.xlu0 %985
    %v988 = vmul.f32 %v981, %v986
    %990 = vrot.lane.b32.xlu0 %v988, 32
    %v991 = vpop.permute.xlu0 %990
    %v993 = vadd.f32 %v983, %v991
    %v994 = vtanh.pop %v993
    %996 = vrot.lane.b32.xlu0 %v994, 64
    %v997 = vpop.permute.xlu0 %996
    %v999 = vmul.f32 %v981, %v997
    %v1000 = vsel %vm900, 1, 0
    %1001 = vset.pattern.permute.xlu0 0
    %1002 = vperm.xlu0 %1001, %v1000
    %v1003 = vpop.permute.xlu0 %1002
    %vm1004 = vcmp.eq.s32.totalorder %v1003, 1
    %v1005 = vsel %vm1004, %v999, %v790
    %v1006 = vsel %vm1004, %v993, %v791
    %1008 = vrot.lane.b32.xlu0 %v1005, 32
    %v1009 = vpop.permute.xlu0 %1008
    %1012 = vrot.lane.b32.xlu0 %v898, 64
    %v1013 = vpop.permute.xlu0 %1012
    %v1015 = vsel %vm259, %v1009, %v1013
    %v1017 = vsel %vm370, %v1015, 0
    %1019 = vmatprep.subr.mxu0 0.0
    %1020 = vmatpush1.msra.mxu0 0.0
    %1021 = vmatprep.subr.mxu0 0.0
    %1022 = vmatpush1.msra.mxu0 0.0
    %1023 = vmatprep.subr.mxu0 0.0
    %1024 = vmatpush1.msra.mxu0 0.0
    %1025 = vmatprep.subr.mxu0 0.0
    %1026 = vmatpush1.msra.mxu0 0.0
    %1027 = vmatprep.subr.mxu0 0.0
    %1028 = vmatpush1.msra.mxu0 0.0
    %1029 = vmatprep.subr.mxu0 0.0
    %1030 = vmatpush1.msra.mxu0 0.0
    %1031 = vmatprep.subr.mxu0 0.0
    %1032 = vmatpush1.msra.mxu0 0.0
    %1033 = vmatprep.subr.mxu0 0.0
    %1034 = vmatpush1.msra.mxu0 0.0
    %1035 = vmatprep.subr.mxu0 0.0
    %1036 = vmatpush1.msra.mxu0 %v248
    %1037 = vmatprep.subr.mxu0 0.0
    %1038 = vmatpush1.msra.mxu0 %v247
    %1039 = vmatprep.subr.mxu0 0.0
    %1040 = vmatpush1.msra.mxu0 %v246
    %1041 = vmatprep.subr.mxu0 0.0
    %1042 = vmatpush1.msra.mxu0 %v245
    %1043 = vmatprep.subr.mxu0 0.0
    %1044 = vmatpush1.msra.mxu0 %v244
    %1045 = vmatprep.subr.mxu0 0.0
    %1046 = vmatpush1.msra.mxu0 %v243
    %1047 = vmatprep.subr.mxu0 0.0
    %1048 = vmatpush1.msra.mxu0 %v242
    %1049 = vmatprep.subr.mxu0 0.0
    %1050 = vmatpush1.msra.mxu0 %v241
    %1051 = vmatprep.subr.mxu0 0.0
    %1052 = vmatpush2.msra.mxu0 0.0
    %1053 = vmatprep.subr.mxu0 0.0
    %1054 = vmatpush2.msra.mxu0 0.0
    %1055 = vmatprep.subr.mxu0 0.0
    %1056 = vmatpush2.msra.mxu0 0.0
    %1057 = vmatprep.subr.mxu0 0.0
    %1058 = vmatpush2.msra.mxu0 0.0
    %1059 = vmatprep.subr.mxu0 0.0
    %1060 = vmatpush2.msra.mxu0 0.0
    %1061 = vmatprep.subr.mxu0 0.0
    %1062 = vmatpush2.msra.mxu0 0.0
    %1063 = vmatprep.subr.mxu0 0.0
    %1064 = vmatpush2.msra.mxu0 0.0
    %1065 = vmatprep.subr.mxu0 0.0
    %1066 = vmatpush2.msra.mxu0 0.0
    %1067 = vmatprep.subr.mxu0 0.0
    %1068 = vmatpush2.msra.mxu0 0.0
    %1069 = vmatprep.subr.mxu0 0.0
    %1070 = vmatpush2.msra.mxu0 0.0
    %1071 = vmatprep.subr.mxu0 0.0
    %1072 = vmatpush2.msra.mxu0 0.0
    %1073 = vmatprep.subr.mxu0 0.0
    %1074 = vmatpush2.msra.mxu0 0.0
    %1075 = vmatprep.subr.mxu0 0.0
    %1076 = vmatpush2.msra.mxu0 0.0
    %1077 = vmatprep.subr.mxu0 0.0
    %1078 = vmatpush2.msra.mxu0 0.0
    %1079 = vmatprep.subr.mxu0 0.0
    %1080 = vmatpush2.msra.mxu0 0.0
    %1081 = vmatprep.subr.mxu0 0.0
    %1082 = vmatpush2.msra.mxu0 0.0
    %1083 = vmatprep.mubr.f32.mxu0 0.0
    %1084 = vmatmul.mubr.f32.gmra.mxu0 %v1017
    %v1085 = vpop.f32.mrf.mxu0
    %v1086 = vadd.f32 %v254, %v1085
    %v1087 = vpop.f32.mrf.mxu0
    %1088 = vdwg.mxu0
    %v1089 = vxor.u32 %v1086, 2147483648
    %v1090 = vmul.f32 %v1089, 1.442695
    %v1091 = vpow.pop %v1090
    %v1092 = vadd.f32 %v1091, 1.0
    %v1093 = vrcp.pop %v1092
    %v1094 = vmul.f32 1.0, %v1093
    %v1095 = vtanh.pop %v1086
    %v1096 = vmul.f32 %v1094, %v899
    %1098 = vrot.lane.b32.xlu0 %v1095, 64
    %v1099 = vpop.permute.xlu0 %1098
    %v1101 = vmul.f32 %v1094, %v1099
    %1103 = vrot.lane.b32.xlu0 %v1101, 32
    %v1104 = vpop.permute.xlu0 %1103
    %v1106 = vadd.f32 %v1096, %v1104
    %v1107 = vtanh.pop %v1106
    %1109 = vrot.lane.b32.xlu0 %v1107, 64
    %v1110 = vpop.permute.xlu0 %1109
    %v1112 = vmul.f32 %v1094, %v1110
    %v1113 = vsel %vm1004, %v1112, %v898
    %v1114 = vsel %vm1004, %v1106, %v899
    %vm1115 = vcmp.gt.s32.totalorder %v256, 4
    %s1116 = scalar_lea.vmem [#allocation2], 32
    %v1117 = vld [vmem:[%s1116] sm:$0xff]
    %v1118 = vsel %vm259, %v1009, 0
    %1120 = vmatprep.subr.mxu0 0.0
    %1121 = vmatpush1.msra.mxu0 0.0
    %1122 = vmatprep.subr.mxu0 0.0
    %1123 = vmatpush1.msra.mxu0 0.0
    %1124 = vmatprep.subr.mxu0 0.0
    %1125 = vmatpush1.msra.mxu0 0.0
    %1126 = vmatprep.subr.mxu0 0.0
    %1127 = vmatpush1.msra.mxu0 0.0
    %1128 = vmatprep.subr.mxu0 0.0
    %1129 = vmatpush1.msra.mxu0 0.0
    %1130 = vmatprep.subr.mxu0 0.0
    %1131 = vmatpush1.msra.mxu0 0.0
    %1132 = vmatprep.subr.mxu0 0.0
    %1133 = vmatpush1.msra.mxu0 0.0
    %1134 = vmatprep.subr.mxu0 0.0
    %1135 = vmatpush1.msra.mxu0 0.0
    %1136 = vmatprep.subr.mxu0 0.0
    %1137 = vmatpush1.msra.mxu0 0.0
    %1138 = vmatprep.subr.mxu0 0.0
    %1139 = vmatpush1.msra.mxu0 0.0
    %1140 = vmatprep.subr.mxu0 0.0
    %1141 = vmatpush1.msra.mxu0 0.0
    %1142 = vmatprep.subr.mxu0 0.0
    %1143 = vmatpush1.msra.mxu0 0.0
    %1144 = vmatprep.subr.mxu0 0.0
    %1145 = vmatpush1.msra.mxu0 %v240
    %1146 = vmatprep.subr.mxu0 0.0
    %1147 = vmatpush1.msra.mxu0 %v239
    %1148 = vmatprep.subr.mxu0 0.0
    %1149 = vmatpush1.msra.mxu0 %v238
    %1150 = vmatprep.subr.mxu0 0.0
    %1151 = vmatpush1.msra.mxu0 %v237
    %1152 = vmatprep.subr.mxu0 0.0
    %1153 = vmatpush2.msra.mxu0 0.0
    %1154 = vmatprep.subr.mxu0 0.0
    %1155 = vmatpush2.msra.mxu0 0.0
    %1156 = vmatprep.subr.mxu0 0.0
    %1157 = vmatpush2.msra.mxu0 0.0
    %1158 = vmatprep.subr.mxu0 0.0
    %1159 = vmatpush2.msra.mxu0 0.0
    %1160 = vmatprep.subr.mxu0 0.0
    %1161 = vmatpush2.msra.mxu0 0.0
    %1162 = vmatprep.subr.mxu0 0.0
    %1163 = vmatpush2.msra.mxu0 0.0
    %1164 = vmatprep.subr.mxu0 0.0
    %1165 = vmatpush2.msra.mxu0 0.0
    %1166 = vmatprep.subr.mxu0 0.0
    %1167 = vmatpush2.msra.mxu0 0.0
    %1168 = vmatprep.subr.mxu0 0.0
    %1169 = vmatpush2.msra.mxu0 0.0
    %1170 = vmatprep.subr.mxu0 0.0
    %1171 = vmatpush2.msra.mxu0 0.0
    %1172 = vmatprep.subr.mxu0 0.0
    %1173 = vmatpush2.msra.mxu0 0.0
    %1174 = vmatprep.subr.mxu0 0.0
    %1175 = vmatpush2.msra.mxu0 0.0
    %1176 = vmatprep.subr.mxu0 0.0
    %1177 = vmatpush2.msra.mxu0 0.0
    %1178 = vmatprep.subr.mxu0 0.0
    %1179 = vmatpush2.msra.mxu0 0.0
    %1180 = vmatprep.subr.mxu0 0.0
    %1181 = vmatpush2.msra.mxu0 0.0
    %1182 = vmatprep.subr.mxu0 0.0
    %1183 = vmatpush2.msra.mxu0 0.0
    %1184 = vmatprep.mubr.f32.mxu0 0.0
    %1185 = vmatmul.mubr.f32.gmra.mxu0 %v1118
    %v1186 = vpop.f32.mrf.mxu0
    %v1187 = vadd.f32 0.0, %v1186
    %v1188 = vpop.f32.mrf.mxu0
    %1189 = vdwg.mxu0
    %v1190 = vadd.f32 %v1117, %v1187
    %v1191 = vxor.u32 %v1190, 2147483648
    %v1192 = vmul.f32 %v1191, 1.442695
    %v1193 = vpow.pop %v1192
    %v1194 = vadd.f32 %v1193, 1.0
    %v1195 = vrcp.pop %v1194
    %v1196 = vmul.f32 1.0, %v1195
    %v1197 = vtanh.pop %v1190
    %v1198 = vmul.f32 %v1196, %v1006
    %1200 = vrot.lane.b32.xlu0 %v1197, 64
    %v1201 = vpop.permute.xlu0 %1200
    %v1203 = vmul.f32 %v1196, %v1201
    %1205 = vrot.lane.b32.xlu0 %v1203, 32
    %v1206 = vpop.permute.xlu0 %1205
    %v1208 = vadd.f32 %v1198, %v1206
    %v1209 = vtanh.pop %v1208
    %1211 = vrot.lane.b32.xlu0 %v1209, 64
    %v1212 = vpop.permute.xlu0 %1211
    %v1214 = vmul.f32 %v1196, %v1212
    %v1215 = vsel %vm1115, 1, 0
    %1216 = vset.pattern.permute.xlu0 0
    %1217 = vperm.xlu0 %1216, %v1215
    %v1218 = vpop.permute.xlu0 %1217
    %vm1219 = vcmp.eq.s32.totalorder %v1218, 1
    %v1220 = vsel %vm1219, %v1214, %v1005
    %v1221 = vsel %vm1219, %v1208, %v1006
    %1223 = vrot.lane.b32.xlu0 %v1220, 32
    %v1224 = vpop.permute.xlu0 %1223
    %1227 = vrot.lane.b32.xlu0 %v1113, 64
    %v1228 = vpop.permute.xlu0 %1227
    %v1230 = vsel %vm259, %v1224, %v1228
    %v1232 = vsel %vm370, %v1230, 0
    %1234 = vmatprep.subr.mxu0 0.0
    %1235 = vmatpush1.msra.mxu0 0.0
    %1236 = vmatprep.subr.mxu0 0.0
    %1237 = vmatpush1.msra.mxu0 0.0
    %1238 = vmatprep.subr.mxu0 0.0
    %1239 = vmatpush1.msra.mxu0 0.0
    %1240 = vmatprep.subr.mxu0 0.0
    %1241 = vmatpush1.msra.mxu0 0.0
    %1242 = vmatprep.subr.mxu0 0.0
    %1243 = vmatpush1.msra.mxu0 0.0
    %1244 = vmatprep.subr.mxu0 0.0
    %1245 = vmatpush1.msra.mxu0 0.0
    %1246 = vmatprep.subr.mxu0 0.0
    %1247 = vmatpush1.msra.mxu0 0.0
    %1248 = vmatprep.subr.mxu0 0.0
    %1249 = vmatpush1.msra.mxu0 0.0
    %1250 = vmatprep.subr.mxu0 0.0
    %1251 = vmatpush1.msra.mxu0 %v248
    %1252 = vmatprep.subr.mxu0 0.0
    %1253 = vmatpush1.msra.mxu0 %v247
    %1254 = vmatprep.subr.mxu0 0.0
    %1255 = vmatpush1.msra.mxu0 %v246
    %1256 = vmatprep.subr.mxu0 0.0
    %1257 = vmatpush1.msra.mxu0 %v245
    %1258 = vmatprep.subr.mxu0 0.0
    %1259 = vmatpush1.msra.mxu0 %v244
    %1260 = vmatprep.subr.mxu0 0.0
    %1261 = vmatpush1.msra.mxu0 %v243
    %1262 = vmatprep.subr.mxu0 0.0
    %1263 = vmatpush1.msra.mxu0 %v242
    %1264 = vmatprep.subr.mxu0 0.0
    %1265 = vmatpush1.msra.mxu0 %v241
    %1266 = vmatprep.subr.mxu0 0.0
    %1267 = vmatpush2.msra.mxu0 0.0
    %1268 = vmatprep.subr.mxu0 0.0
    %1269 = vmatpush2.msra.mxu0 0.0
    %1270 = vmatprep.subr.mxu0 0.0
    %1271 = vmatpush2.msra.mxu0 0.0
    %1272 = vmatprep.subr.mxu0 0.0
    %1273 = vmatpush2.msra.mxu0 0.0
    %1274 = vmatprep.subr.mxu0 0.0
    %1275 = vmatpush2.msra.mxu0 0.0
    %1276 = vmatprep.subr.mxu0 0.0
    %1277 = vmatpush2.msra.mxu0 0.0
    %1278 = vmatprep.subr.mxu0 0.0
    %1279 = vmatpush2.msra.mxu0 0.0
    %1280 = vmatprep.subr.mxu0 0.0
    %1281 = vmatpush2.msra.mxu0 0.0
    %1282 = vmatprep.subr.mxu0 0.0
    %1283 = vmatpush2.msra.mxu0 0.0
    %1284 = vmatprep.subr.mxu0 0.0
    %1285 = vmatpush2.msra.mxu0 0.0
    %1286 = vmatprep.subr.mxu0 0.0
    %1287 = vmatpush2.msra.mxu0 0.0
    %1288 = vmatprep.subr.mxu0 0.0
    %1289 = vmatpush2.msra.mxu0 0.0
    %1290 = vmatprep.subr.mxu0 0.0
    %1291 = vmatpush2.msra.mxu0 0.0
    %1292 = vmatprep.subr.mxu0 0.0
    %1293 = vmatpush2.msra.mxu0 0.0
    %1294 = vmatprep.subr.mxu0 0.0
    %1295 = vmatpush2.msra.mxu0 0.0
    %1296 = vmatprep.subr.mxu0 0.0
    %1297 = vmatpush2.msra.mxu0 0.0
    %1298 = vmatprep.mubr.f32.mxu0 0.0
    %1299 = vmatmul.mubr.f32.gmra.mxu0 %v1232
    %v1300 = vpop.f32.mrf.mxu0
    %v1301 = vadd.f32 %v254, %v1300
    %v1302 = vpop.f32.mrf.mxu0
    %1303 = vdwg.mxu0
    %v1304 = vxor.u32 %v1301, 2147483648
    %v1305 = vmul.f32 %v1304, 1.442695
    %v1306 = vpow.pop %v1305
    %v1307 = vadd.f32 %v1306, 1.0
    %v1308 = vrcp.pop %v1307
    %v1309 = vmul.f32 1.0, %v1308
    %v1310 = vtanh.pop %v1301
    %v1311 = vmul.f32 %v1309, %v1114
    %1313 = vrot.lane.b32.xlu0 %v1310, 64
    %v1314 = vpop.permute.xlu0 %1313
    %v1316 = vmul.f32 %v1309, %v1314
    %1318 = vrot.lane.b32.xlu0 %v1316, 32
    %v1319 = vpop.permute.xlu0 %1318
    %v1321 = vadd.f32 %v1311, %v1319
    %v1322 = vtanh.pop %v1321
    %1324 = vrot.lane.b32.xlu0 %v1322, 64
    %v1325 = vpop.permute.xlu0 %1324
    %v1327 = vmul.f32 %v1309, %v1325
    %v1328 = vsel %vm1219, %v1327, %v1113
    %v1329 = vsel %vm1219, %v1321, %v1114
    %vm1330 = vcmp.gt.s32.totalorder %v256, 5
    %s1331 = scalar_lea.vmem [#allocation2], 40
    %v1332 = vld [vmem:[%s1331] sm:$0xff]
    %v1333 = vsel %vm259, %v1224, 0
    %1335 = vmatprep.subr.mxu0 0.0
    %1336 = vmatpush1.msra.mxu0 0.0
    %1337 = vmatprep.subr.mxu0 0.0
    %1338 = vmatpush1.msra.mxu0 0.0
    %1339 = vmatprep.subr.mxu0 0.0
    %1340 = vmatpush1.msra.mxu0 0.0
    %1341 = vmatprep.subr.mxu0 0.0
    %1342 = vmatpush1.msra.mxu0 0.0
    %1343 = vmatprep.subr.mxu0 0.0
    %1344 = vmatpush1.msra.mxu0 0.0
    %1345 = vmatprep.subr.mxu0 0.0
    %1346 = vmatpush1.msra.mxu0 0.0
    %1347 = vmatprep.subr.mxu0 0.0
    %1348 = vmatpush1.msra.mxu0 0.0
    %1349 = vmatprep.subr.mxu0 0.0
    %1350 = vmatpush1.msra.mxu0 0.0
    %1351 = vmatprep.subr.mxu0 0.0
    %1352 = vmatpush1.msra.mxu0 0.0
    %1353 = vmatprep.subr.mxu0 0.0
    %1354 = vmatpush1.msra.mxu0 0.0
    %1355 = vmatprep.subr.mxu0 0.0
    %1356 = vmatpush1.msra.mxu0 0.0
    %1357 = vmatprep.subr.mxu0 0.0
    %1358 = vmatpush1.msra.mxu0 0.0
    %1359 = vmatprep.subr.mxu0 0.0
    %1360 = vmatpush1.msra.mxu0 %v240
    %1361 = vmatprep.subr.mxu0 0.0
    %1362 = vmatpush1.msra.mxu0 %v239
    %1363 = vmatprep.subr.mxu0 0.0
    %1364 = vmatpush1.msra.mxu0 %v238
    %1365 = vmatprep.subr.mxu0 0.0
    %1366 = vmatpush1.msra.mxu0 %v237
    %1367 = vmatprep.subr.mxu0 0.0
    %1368 = vmatpush2.msra.mxu0 0.0
    %1369 = vmatprep.subr.mxu0 0.0
    %1370 = vmatpush2.msra.mxu0 0.0
    %1371 = vmatprep.subr.mxu0 0.0
    %1372 = vmatpush2.msra.mxu0 0.0
    %1373 = vmatprep.subr.mxu0 0.0
    %1374 = vmatpush2.msra.mxu0 0.0
    %1375 = vmatprep.subr.mxu0 0.0
    %1376 = vmatpush2.msra.mxu0 0.0
    %1377 = vmatprep.subr.mxu0 0.0
    %1378 = vmatpush2.msra.mxu0 0.0
    %1379 = vmatprep.subr.mxu0 0.0
    %1380 = vmatpush2.msra.mxu0 0.0
    %1381 = vmatprep.subr.mxu0 0.0
    %1382 = vmatpush2.msra.mxu0 0.0
    %1383 = vmatprep.subr.mxu0 0.0
    %1384 = vmatpush2.msra.mxu0 0.0
    %1385 = vmatprep.subr.mxu0 0.0
    %1386 = vmatpush2.msra.mxu0 0.0
    %1387 = vmatprep.subr.mxu0 0.0
    %1388 = vmatpush2.msra.mxu0 0.0
    %1389 = vmatprep.subr.mxu0 0.0
    %1390 = vmatpush2.msra.mxu0 0.0
    %1391 = vmatprep.subr.mxu0 0.0
    %1392 = vmatpush2.msra.mxu0 0.0
    %1393 = vmatprep.subr.mxu0 0.0
    %1394 = vmatpush2.msra.mxu0 0.0
    %1395 = vmatprep.subr.mxu0 0.0
    %1396 = vmatpush2.msra.mxu0 0.0
    %1397 = vmatprep.subr.mxu0 0.0
    %1398 = vmatpush2.msra.mxu0 0.0
    %1399 = vmatprep.mubr.f32.mxu0 0.0
    %1400 = vmatmul.mubr.f32.gmra.mxu0 %v1333
    %v1401 = vpop.f32.mrf.mxu0
    %v1402 = vadd.f32 0.0, %v1401
    %v1403 = vpop.f32.mrf.mxu0
    %1404 = vdwg.mxu0
    %v1405 = vadd.f32 %v1332, %v1402
    %v1406 = vxor.u32 %v1405, 2147483648
    %v1407 = vmul.f32 %v1406, 1.442695
    %v1408 = vpow.pop %v1407
    %v1409 = vadd.f32 %v1408, 1.0
    %v1410 = vrcp.pop %v1409
    %v1411 = vmul.f32 1.0, %v1410
    %v1412 = vtanh.pop %v1405
    %v1413 = vmul.f32 %v1411, %v1221
    %1415 = vrot.lane.b32.xlu0 %v1412, 64
    %v1416 = vpop.permute.xlu0 %1415
    %v1418 = vmul.f32 %v1411, %v1416
    %1420 = vrot.lane.b32.xlu0 %v1418, 32
    %v1421 = vpop.permute.xlu0 %1420
    %v1423 = vadd.f32 %v1413, %v1421
    %v1424 = vtanh.pop %v1423
    %1426 = vrot.lane.b32.xlu0 %v1424, 64
    %v1427 = vpop.permute.xlu0 %1426
    %v1429 = vmul.f32 %v1411, %v1427
    %v1430 = vsel %vm1330, 1, 0
    %1431 = vset.pattern.permute.xlu0 0
    %1432 = vperm.xlu0 %1431, %v1430
    %v1433 = vpop.permute.xlu0 %1432
    %vm1434 = vcmp.eq.s32.totalorder %v1433, 1
    %v1435 = vsel %vm1434, %v1429, %v1220
    %v1436 = vsel %vm1434, %v1423, %v1221
    %1438 = vrot.lane.b32.xlu0 %v1435, 32
    %v1439 = vpop.permute.xlu0 %1438
    %1442 = vrot.lane.b32.xlu0 %v1328, 64
    %v1443 = vpop.permute.xlu0 %1442
    %v1445 = vsel %vm259, %v1439, %v1443
    %v1447 = vsel %vm370, %v1445, 0
    %1449 = vmatprep.subr.mxu0 0.0
    %1450 = vmatpush1.msra.mxu0 0.0
    %1451 = vmatprep.subr.mxu0 0.0
    %1452 = vmatpush1.msra.mxu0 0.0
    %1453 = vmatprep.subr.mxu0 0.0
    %1454 = vmatpush1.msra.mxu0 0.0
    %1455 = vmatprep.subr.mxu0 0.0
    %1456 = vmatpush1.msra.mxu0 0.0
    %1457 = vmatprep.subr.mxu0 0.0
    %1458 = vmatpush1.msra.mxu0 0.0
    %1459 = vmatprep.subr.mxu0 0.0
    %1460 = vmatpush1.msra.mxu0 0.0
    %1461 = vmatprep.subr.mxu0 0.0
    %1462 = vmatpush1.msra.mxu0 0.0
    %1463 = vmatprep.subr.mxu0 0.0
    %1464 = vmatpush1.msra.mxu0 0.0
    %1465 = vmatprep.subr.mxu0 0.0
    %1466 = vmatpush1.msra.mxu0 %v248
    %1467 = vmatprep.subr.mxu0 0.0
    %1468 = vmatpush1.msra.mxu0 %v247
    %1469 = vmatprep.subr.mxu0 0.0
    %1470 = vmatpush1.msra.mxu0 %v246
    %1471 = vmatprep.subr.mxu0 0.0
    %1472 = vmatpush1.msra.mxu0 %v245
    %1473 = vmatprep.subr.mxu0 0.0
    %1474 = vmatpush1.msra.mxu0 %v244
    %1475 = vmatprep.subr.mxu0 0.0
    %1476 = vmatpush1.msra.mxu0 %v243
    %1477 = vmatprep.subr.mxu0 0.0
    %1478 = vmatpush1.msra.mxu0 %v242
    %1479 = vmatprep.subr.mxu0 0.0
    %1480 = vmatpush1.msra.mxu0 %v241
    %1481 = vmatprep.subr.mxu0 0.0
    %1482 = vmatpush2.msra.mxu0 0.0
    %1483 = vmatprep.subr.mxu0 0.0
    %1484 = vmatpush2.msra.mxu0 0.0
    %1485 = vmatprep.subr.mxu0 0.0
    %1486 = vmatpush2.msra.mxu0 0.0
    %1487 = vmatprep.subr.mxu0 0.0
    %1488 = vmatpush2.msra.mxu0 0.0
    %1489 = vmatprep.subr.mxu0 0.0
    %1490 = vmatpush2.msra.mxu0 0.0
    %1491 = vmatprep.subr.mxu0 0.0
    %1492 = vmatpush2.msra.mxu0 0.0
    %1493 = vmatprep.subr.mxu0 0.0
    %1494 = vmatpush2.msra.mxu0 0.0
    %1495 = vmatprep.subr.mxu0 0.0
    %1496 = vmatpush2.msra.mxu0 0.0
    %1497 = vmatprep.subr.mxu0 0.0
    %1498 = vmatpush2.msra.mxu0 0.0
    %1499 = vmatprep.subr.mxu0 0.0
    %1500 = vmatpush2.msra.mxu0 0.0
    %1501 = vmatprep.subr.mxu0 0.0
    %1502 = vmatpush2.msra.mxu0 0.0
    %1503 = vmatprep.subr.mxu0 0.0
    %1504 = vmatpush2.msra.mxu0 0.0
    %1505 = vmatprep.subr.mxu0 0.0
    %1506 = vmatpush2.msra.mxu0 0.0
    %1507 = vmatprep.subr.mxu0 0.0
    %1508 = vmatpush2.msra.mxu0 0.0
    %1509 = vmatprep.subr.mxu0 0.0
    %1510 = vmatpush2.msra.mxu0 0.0
    %1511 = vmatprep.subr.mxu0 0.0
    %1512 = vmatpush2.msra.mxu0 0.0
    %1513 = vmatprep.mubr.f32.mxu0 0.0
    %1514 = vmatmul.mubr.f32.gmra.mxu0 %v1447
    %v1515 = vpop.f32.mrf.mxu0
    %v1516 = vadd.f32 %v254, %v1515
    %v1517 = vpop.f32.mrf.mxu0
    %1518 = vdwg.mxu0
    %v1519 = vxor.u32 %v1516, 2147483648
    %v1520 = vmul.f32 %v1519, 1.442695
    %v1521 = vpow.pop %v1520
    %v1522 = vadd.f32 %v1521, 1.0
    %v1523 = vrcp.pop %v1522
    %v1524 = vmul.f32 1.0, %v1523
    %v1525 = vtanh.pop %v1516
    %v1526 = vmul.f32 %v1524, %v1329
    %1528 = vrot.lane.b32.xlu0 %v1525, 64
    %v1529 = vpop.permute.xlu0 %1528
    %v1531 = vmul.f32 %v1524, %v1529
    %1533 = vrot.lane.b32.xlu0 %v1531, 32
    %v1534 = vpop.permute.xlu0 %1533
    %v1536 = vadd.f32 %v1526, %v1534
    %v1537 = vtanh.pop %v1536
    %1539 = vrot.lane.b32.xlu0 %v1537, 64
    %v1540 = vpop.permute.xlu0 %1539
    %v1542 = vmul.f32 %v1524, %v1540
    %v1543 = vsel %vm1434, %v1542, %v1328
    %v1544 = vsel %vm1434, %v1536, %v1329
    %vm1545 = vcmp.gt.s32.totalorder %v256, 6
    %s1546 = scalar_lea.vmem [#allocation2], 48
    %v1547 = vld [vmem:[%s1546] sm:$0xff]
    %v1548 = vsel %vm259, %v1439, 0
    %1550 = vmatprep.subr.mxu0 0.0
    %1551 = vmatpush1.msra.mxu0 0.0
    %1552 = vmatprep.subr.mxu0 0.0
    %1553 = vmatpush1.msra.mxu0 0.0
    %1554 = vmatprep.subr.mxu0 0.0
    %1555 = vmatpush1.msra.mxu0 0.0
    %1556 = vmatprep.subr.mxu0 0.0
    %1557 = vmatpush1.msra.mxu0 0.0
    %1558 = vmatprep.subr.mxu0 0.0
    %1559 = vmatpush1.msra.mxu0 0.0
    %1560 = vmatprep.subr.mxu0 0.0
    %1561 = vmatpush1.msra.mxu0 0.0
    %1562 = vmatprep.subr.mxu0 0.0
    %1563 = vmatpush1.msra.mxu0 0.0
    %1564 = vmatprep.subr.mxu0 0.0
    %1565 = vmatpush1.msra.mxu0 0.0
    %1566 = vmatprep.subr.mxu0 0.0
    %1567 = vmatpush1.msra.mxu0 0.0
    %1568 = vmatprep.subr.mxu0 0.0
    %1569 = vmatpush1.msra.mxu0 0.0
    %1570 = vmatprep.subr.mxu0 0.0
    %1571 = vmatpush1.msra.mxu0 0.0
    %1572 = vmatprep.subr.mxu0 0.0
    %1573 = vmatpush1.msra.mxu0 0.0
    %1574 = vmatprep.subr.mxu0 0.0
    %1575 = vmatpush1.msra.mxu0 %v240
    %1576 = vmatprep.subr.mxu0 0.0
    %1577 = vmatpush1.msra.mxu0 %v239
    %1578 = vmatprep.subr.mxu0 0.0
    %1579 = vmatpush1.msra.mxu0 %v238
    %1580 = vmatprep.subr.mxu0 0.0
    %1581 = vmatpush1.msra.mxu0 %v237
    %1582 = vmatprep.subr.mxu0 0.0
    %1583 = vmatpush2.msra.mxu0 0.0
    %1584 = vmatprep.subr.mxu0 0.0
    %1585 = vmatpush2.msra.mxu0 0.0
    %1586 = vmatprep.subr.mxu0 0.0
    %1587 = vmatpush2.msra.mxu0 0.0
    %1588 = vmatprep.subr.mxu0 0.0
    %1589 = vmatpush2.msra.mxu0 0.0
    %1590 = vmatprep.subr.mxu0 0.0
    %1591 = vmatpush2.msra.mxu0 0.0
    %1592 = vmatprep.subr.mxu0 0.0
    %1593 = vmatpush2.msra.mxu0 0.0
    %1594 = vmatprep.subr.mxu0 0.0
    %1595 = vmatpush2.msra.mxu0 0.0
    %1596 = vmatprep.subr.mxu0 0.0
    %1597 = vmatpush2.msra.mxu0 0.0
    %1598 = vmatprep.subr.mxu0 0.0
    %1599 = vmatpush2.msra.mxu0 0.0
    %1600 = vmatprep.subr.mxu0 0.0
    %1601 = vmatpush2.msra.mxu0 0.0
    %1602 = vmatprep.subr.mxu0 0.0
    %1603 = vmatpush2.msra.mxu0 0.0
    %1604 = vmatprep.subr.mxu0 0.0
    %1605 = vmatpush2.msra.mxu0 0.0
    %1606 = vmatprep.subr.mxu0 0.0
    %1607 = vmatpush2.msra.mxu0 0.0
    %1608 = vmatprep.subr.mxu0 0.0
    %1609 = vmatpush2.msra.mxu0 0.0
    %1610 = vmatprep.subr.mxu0 0.0
    %1611 = vmatpush2.msra.mxu0 0.0
    %1612 = vmatprep.subr.mxu0 0.0
    %1613 = vmatpush2.msra.mxu0 0.0
    %1614 = vmatprep.mubr.f32.mxu0 0.0
    %1615 = vmatmul.mubr.f32.gmra.mxu0 %v1548
    %v1616 = vpop.f32.mrf.mxu0
    %v1617 = vadd.f32 0.0, %v1616
    %v1618 = vpop.f32.mrf.mxu0
    %1619 = vdwg.mxu0
    %v1620 = vadd.f32 %v1547, %v1617
    %v1621 = vxor.u32 %v1620, 2147483648
    %v1622 = vmul.f32 %v1621, 1.442695
    %v1623 = vpow.pop %v1622
    %v1624 = vadd.f32 %v1623, 1.0
    %v1625 = vrcp.pop %v1624
    %v1626 = vmul.f32 1.0, %v1625
    %v1627 = vtanh.pop %v1620
    %v1628 = vmul.f32 %v1626, %v1436
    %1630 = vrot.lane.b32.xlu0 %v1627, 64
    %v1631 = vpop.permute.xlu0 %1630
    %v1633 = vmul.f32 %v1626, %v1631
    %1635 = vrot.lane.b32.xlu0 %v1633, 32
    %v1636 = vpop.permute.xlu0 %1635
    %v1638 = vadd.f32 %v1628, %v1636
    %v1639 = vtanh.pop %v1638
    %1641 = vrot.lane.b32.xlu0 %v1639, 64
    %v1642 = vpop.permute.xlu0 %1641
    %v1644 = vmul.f32 %v1626, %v1642
    %v1645 = vsel %vm1545, 1, 0
    %1646 = vset.pattern.permute.xlu0 0
    %1647 = vperm.xlu0 %1646, %v1645
    %v1648 = vpop.permute.xlu0 %1647
    %vm1649 = vcmp.eq.s32.totalorder %v1648, 1
    %v1650 = vsel %vm1649, %v1644, %v1435
    %v1651 = vsel %vm1649, %v1638, %v1436
    %1653 = vrot.lane.b32.xlu0 %v1650, 32
    %v1654 = vpop.permute.xlu0 %1653
    %1657 = vrot.lane.b32.xlu0 %v1543, 64
    %v1658 = vpop.permute.xlu0 %1657
    %v1660 = vsel %vm259, %v1654, %v1658
    %v1662 = vsel %vm370, %v1660, 0
    %1664 = vmatprep.subr.mxu0 0.0
    %1665 = vmatpush1.msra.mxu0 0.0
    %1666 = vmatprep.subr.mxu0 0.0
    %1667 = vmatpush1.msra.mxu0 0.0
    %1668 = vmatprep.subr.mxu0 0.0
    %1669 = vmatpush1.msra.mxu0 0.0
    %1670 = vmatprep.subr.mxu0 0.0
    %1671 = vmatpush1.msra.mxu0 0.0
    %1672 = vmatprep.subr.mxu0 0.0
    %1673 = vmatpush1.msra.mxu0 0.0
    %1674 = vmatprep.subr.mxu0 0.0
    %1675 = vmatpush1.msra.mxu0 0.0
    %1676 = vmatprep.subr.mxu0 0.0
    %1677 = vmatpush1.msra.mxu0 0.0
    %1678 = vmatprep.subr.mxu0 0.0
    %1679 = vmatpush1.msra.mxu0 0.0
    %1680 = vmatprep.subr.mxu0 0.0
    %1681 = vmatpush1.msra.mxu0 %v248
    %1682 = vmatprep.subr.mxu0 0.0
    %1683 = vmatpush1.msra.mxu0 %v247
    %1684 = vmatprep.subr.mxu0 0.0
    %1685 = vmatpush1.msra.mxu0 %v246
    %1686 = vmatprep.subr.mxu0 0.0
    %1687 = vmatpush1.msra.mxu0 %v245
    %1688 = vmatprep.subr.mxu0 0.0
    %1689 = vmatpush1.msra.mxu0 %v244
    %1690 = vmatprep.subr.mxu0 0.0
    %1691 = vmatpush1.msra.mxu0 %v243
    %1692 = vmatprep.subr.mxu0 0.0
    %1693 = vmatpush1.msra.mxu0 %v242
    %1694 = vmatprep.subr.mxu0 0.0
    %1695 = vmatpush1.msra.mxu0 %v241
    %1696 = vmatprep.subr.mxu0 0.0
    %1697 = vmatpush2.msra.mxu0 0.0
    %1698 = vmatprep.subr.mxu0 0.0
    %1699 = vmatpush2.msra.mxu0 0.0
    %1700 = vmatprep.subr.mxu0 0.0
    %1701 = vmatpush2.msra.mxu0 0.0
    %1702 = vmatprep.subr.mxu0 0.0
    %1703 = vmatpush2.msra.mxu0 0.0
    %1704 = vmatprep.subr.mxu0 0.0
    %1705 = vmatpush2.msra.mxu0 0.0
    %1706 = vmatprep.subr.mxu0 0.0
    %1707 = vmatpush2.msra.mxu0 0.0
    %1708 = vmatprep.subr.mxu0 0.0
    %1709 = vmatpush2.msra.mxu0 0.0
    %1710 = vmatprep.subr.mxu0 0.0
    %1711 = vmatpush2.msra.mxu0 0.0
    %1712 = vmatprep.subr.mxu0 0.0
    %1713 = vmatpush2.msra.mxu0 0.0
    %1714 = vmatprep.subr.mxu0 0.0
    %1715 = vmatpush2.msra.mxu0 0.0
    %1716 = vmatprep.subr.mxu0 0.0
    %1717 = vmatpush2.msra.mxu0 0.0
    %1718 = vmatprep.subr.mxu0 0.0
    %1719 = vmatpush2.msra.mxu0 0.0
    %1720 = vmatprep.subr.mxu0 0.0
    %1721 = vmatpush2.msra.mxu0 0.0
    %1722 = vmatprep.subr.mxu0 0.0
    %1723 = vmatpush2.msra.mxu0 0.0
    %1724 = vmatprep.subr.mxu0 0.0
    %1725 = vmatpush2.msra.mxu0 0.0
    %1726 = vmatprep.subr.mxu0 0.0
    %1727 = vmatpush2.msra.mxu0 0.0
    %1728 = vmatprep.mubr.f32.mxu0 0.0
    %1729 = vmatmul.mubr.f32.gmra.mxu0 %v1662
    %v1730 = vpop.f32.mrf.mxu0
    %v1731 = vadd.f32 %v254, %v1730
    %v1732 = vpop.f32.mrf.mxu0
    %1733 = vdwg.mxu0
    %v1734 = vxor.u32 %v1731, 2147483648
    %v1735 = vmul.f32 %v1734, 1.442695
    %v1736 = vpow.pop %v1735
    %v1737 = vadd.f32 %v1736, 1.0
    %v1738 = vrcp.pop %v1737
    %v1739 = vmul.f32 1.0, %v1738
    %v1740 = vtanh.pop %v1731
    %v1741 = vmul.f32 %v1739, %v1544
    %1743 = vrot.lane.b32.xlu0 %v1740, 64
    %v1744 = vpop.permute.xlu0 %1743
    %v1746 = vmul.f32 %v1739, %v1744
    %1748 = vrot.lane.b32.xlu0 %v1746, 32
    %v1749 = vpop.permute.xlu0 %1748
    %v1751 = vadd.f32 %v1741, %v1749
    %v1752 = vtanh.pop %v1751
    %1754 = vrot.lane.b32.xlu0 %v1752, 64
    %v1755 = vpop.permute.xlu0 %1754
    %v1757 = vmul.f32 %v1739, %v1755
    %v1758 = vsel %vm1649, %v1757, %v1543
    %v1759 = vsel %vm1649, %v1751, %v1544
    %vm1760 = vcmp.gt.s32.totalorder %v256, 7
    %s1761 = scalar_lea.vmem [#allocation2], 56
    %v1762 = vld [vmem:[%s1761] sm:$0xff]
    %v1763 = vsel %vm259, %v1654, 0
    %1765 = vmatprep.subr.mxu0 0.0
    %1766 = vmatpush1.msra.mxu0 0.0
    %1767 = vmatprep.subr.mxu0 0.0
    %1768 = vmatpush1.msra.mxu0 0.0
    %1769 = vmatprep.subr.mxu0 0.0
    %1770 = vmatpush1.msra.mxu0 0.0
    %1771 = vmatprep.subr.mxu0 0.0
    %1772 = vmatpush1.msra.mxu0 0.0
    %1773 = vmatprep.subr.mxu0 0.0
    %1774 = vmatpush1.msra.mxu0 0.0
    %1775 = vmatprep.subr.mxu0 0.0
    %1776 = vmatpush1.msra.mxu0 0.0
    %1777 = vmatprep.subr.mxu0 0.0
    %1778 = vmatpush1.msra.mxu0 0.0
    %1779 = vmatprep.subr.mxu0 0.0
    %1780 = vmatpush1.msra.mxu0 0.0
    %1781 = vmatprep.subr.mxu0 0.0
    %1782 = vmatpush1.msra.mxu0 0.0
    %1783 = vmatprep.subr.mxu0 0.0
    %1784 = vmatpush1.msra.mxu0 0.0
    %1785 = vmatprep.subr.mxu0 0.0
    %1786 = vmatpush1.msra.mxu0 0.0
    %1787 = vmatprep.subr.mxu0 0.0
    %1788 = vmatpush1.msra.mxu0 0.0
    %1789 = vmatprep.subr.mxu0 0.0
    %1790 = vmatpush1.msra.mxu0 %v240
    %1791 = vmatprep.subr.mxu0 0.0
    %1792 = vmatpush1.msra.mxu0 %v239
    %1793 = vmatprep.subr.mxu0 0.0
    %1794 = vmatpush1.msra.mxu0 %v238
    %1795 = vmatprep.subr.mxu0 0.0
    %1796 = vmatpush1.msra.mxu0 %v237
    %1797 = vmatprep.subr.mxu0 0.0
    %1798 = vmatpush2.msra.mxu0 0.0
    %1799 = vmatprep.subr.mxu0 0.0
    %1800 = vmatpush2.msra.mxu0 0.0
    %1801 = vmatprep.subr.mxu0 0.0
    %1802 = vmatpush2.msra.mxu0 0.0
    %1803 = vmatprep.subr.mxu0 0.0
    %1804 = vmatpush2.msra.mxu0 0.0
    %1805 = vmatprep.subr.mxu0 0.0
    %1806 = vmatpush2.msra.mxu0 0.0
    %1807 = vmatprep.subr.mxu0 0.0
    %1808 = vmatpush2.msra.mxu0 0.0
    %1809 = vmatprep.subr.mxu0 0.0
    %1810 = vmatpush2.msra.mxu0 0.0
    %1811 = vmatprep.subr.mxu0 0.0
    %1812 = vmatpush2.msra.mxu0 0.0
    %1813 = vmatprep.subr.mxu0 0.0
    %1814 = vmatpush2.msra.mxu0 0.0
    %1815 = vmatprep.subr.mxu0 0.0
    %1816 = vmatpush2.msra.mxu0 0.0
    %1817 = vmatprep.subr.mxu0 0.0
    %1818 = vmatpush2.msra.mxu0 0.0
    %1819 = vmatprep.subr.mxu0 0.0
    %1820 = vmatpush2.msra.mxu0 0.0
    %1821 = vmatprep.subr.mxu0 0.0
    %1822 = vmatpush2.msra.mxu0 0.0
    %1823 = vmatprep.subr.mxu0 0.0
    %1824 = vmatpush2.msra.mxu0 0.0
    %1825 = vmatprep.subr.mxu0 0.0
    %1826 = vmatpush2.msra.mxu0 0.0
    %1827 = vmatprep.subr.mxu0 0.0
    %1828 = vmatpush2.msra.mxu0 0.0
    %1829 = vmatprep.mubr.f32.mxu0 0.0
    %1830 = vmatmul.mubr.f32.gmra.mxu0 %v1763
    %v1831 = vpop.f32.mrf.mxu0
    %v1832 = vadd.f32 0.0, %v1831
    %v1833 = vpop.f32.mrf.mxu0
    %1834 = vdwg.mxu0
    %v1835 = vadd.f32 %v1762, %v1832
    %v1836 = vxor.u32 %v1835, 2147483648
    %v1837 = vmul.f32 %v1836, 1.442695
    %v1838 = vpow.pop %v1837
    %v1839 = vadd.f32 %v1838, 1.0
    %v1840 = vrcp.pop %v1839
    %v1841 = vmul.f32 1.0, %v1840
    %v1842 = vtanh.pop %v1835
    %v1843 = vmul.f32 %v1841, %v1651
    %1845 = vrot.lane.b32.xlu0 %v1842, 64
    %v1846 = vpop.permute.xlu0 %1845
    %v1848 = vmul.f32 %v1841, %v1846
    %1850 = vrot.lane.b32.xlu0 %v1848, 32
    %v1851 = vpop.permute.xlu0 %1850
    %v1853 = vadd.f32 %v1843, %v1851
    %v1854 = vtanh.pop %v1853
    %1856 = vrot.lane.b32.xlu0 %v1854, 64
    %v1857 = vpop.permute.xlu0 %1856
    %v1859 = vmul.f32 %v1841, %v1857
    %v1860 = vsel %vm1760, 1, 0
    %1861 = vset.pattern.permute.xlu0 0
    %1862 = vperm.xlu0 %1861, %v1860
    %v1863 = vpop.permute.xlu0 %1862
    %vm1864 = vcmp.eq.s32.totalorder %v1863, 1
    %v1865 = vsel %vm1864, %v1859, %v1650
    %1867 = vrot.lane.b32.xlu0 %v1865, 32
    %v1868 = vpop.permute.xlu0 %1867
    %1871 = vrot.lane.b32.xlu0 %v1758, 64
    %v1872 = vpop.permute.xlu0 %1871
    %v1874 = vsel %vm259, %v1868, %v1872
    %v1876 = vsel %vm370, %v1874, 0
    %1878 = vmatprep.subr.mxu0 0.0
    %1879 = vmatpush1.msra.mxu0 0.0
    %1880 = vmatprep.subr.mxu0 0.0
    %1881 = vmatpush1.msra.mxu0 0.0
    %1882 = vmatprep.subr.mxu0 0.0
    %1883 = vmatpush1.msra.mxu0 0.0
    %1884 = vmatprep.subr.mxu0 0.0
    %1885 = vmatpush1.msra.mxu0 0.0
    %1886 = vmatprep.subr.mxu0 0.0
    %1887 = vmatpush1.msra.mxu0 0.0
    %1888 = vmatprep.subr.mxu0 0.0
    %1889 = vmatpush1.msra.mxu0 0.0
    %1890 = vmatprep.subr.mxu0 0.0
    %1891 = vmatpush1.msra.mxu0 0.0
    %1892 = vmatprep.subr.mxu0 0.0
    %1893 = vmatpush1.msra.mxu0 0.0
    %1894 = vmatprep.subr.mxu0 0.0
    %1895 = vmatpush1.msra.mxu0 %v248
    %1896 = vmatprep.subr.mxu0 0.0
    %1897 = vmatpush1.msra.mxu0 %v247
    %1898 = vmatprep.subr.mxu0 0.0
    %1899 = vmatpush1.msra.mxu0 %v246
    %1900 = vmatprep.subr.mxu0 0.0
    %1901 = vmatpush1.msra.mxu0 %v245
    %1902 = vmatprep.subr.mxu0 0.0
    %1903 = vmatpush1.msra.mxu0 %v244
    %1904 = vmatprep.subr.mxu0 0.0
    %1905 = vmatpush1.msra.mxu0 %v243
    %1906 = vmatprep.subr.mxu0 0.0
    %1907 = vmatpush1.msra.mxu0 %v242
    %1908 = vmatprep.subr.mxu0 0.0
    %1909 = vmatpush1.msra.mxu0 %v241
    %1910 = vmatprep.subr.mxu0 0.0
    %1911 = vmatpush2.msra.mxu0 0.0
    %1912 = vmatprep.subr.mxu0 0.0
    %1913 = vmatpush2.msra.mxu0 0.0
    %1914 = vmatprep.subr.mxu0 0.0
    %1915 = vmatpush2.msra.mxu0 0.0
    %1916 = vmatprep.subr.mxu0 0.0
    %1917 = vmatpush2.msra.mxu0 0.0
    %1918 = vmatprep.subr.mxu0 0.0
    %1919 = vmatpush2.msra.mxu0 0.0
    %1920 = vmatprep.subr.mxu0 0.0
    %1921 = vmatpush2.msra.mxu0 0.0
    %1922 = vmatprep.subr.mxu0 0.0
    %1923 = vmatpush2.msra.mxu0 0.0
    %1924 = vmatprep.subr.mxu0 0.0
    %1925 = vmatpush2.msra.mxu0 0.0
    %1926 = vmatprep.subr.mxu0 0.0
    %1927 = vmatpush2.msra.mxu0 0.0
    %1928 = vmatprep.subr.mxu0 0.0
    %1929 = vmatpush2.msra.mxu0 0.0
    %1930 = vmatprep.subr.mxu0 0.0
    %1931 = vmatpush2.msra.mxu0 0.0
    %1932 = vmatprep.subr.mxu0 0.0
    %1933 = vmatpush2.msra.mxu0 0.0
    %1934 = vmatprep.subr.mxu0 0.0
    %1935 = vmatpush2.msra.mxu0 0.0
    %1936 = vmatprep.subr.mxu0 0.0
    %1937 = vmatpush2.msra.mxu0 0.0
    %1938 = vmatprep.subr.mxu0 0.0
    %1939 = vmatpush2.msra.mxu0 0.0
    %1940 = vmatprep.subr.mxu0 0.0
    %1941 = vmatpush2.msra.mxu0 0.0
    %1942 = vmatprep.mubr.f32.mxu0 0.0
    %1943 = vmatmul.mubr.f32.gmra.mxu0 %v1876
    %v1944 = vpop.f32.mrf.mxu0
    %v1945 = vadd.f32 %v254, %v1944
    %v1946 = vpop.f32.mrf.mxu0
    %1947 = vdwg.mxu0
    %v1948 = vxor.u32 %v1945, 2147483648
    %v1949 = vmul.f32 %v1948, 1.442695
    %v1950 = vpow.pop %v1949
    %v1951 = vadd.f32 %v1950, 1.0
    %v1952 = vrcp.pop %v1951
    %v1953 = vmul.f32 1.0, %v1952
    %v1954 = vtanh.pop %v1945
    %v1955 = vmul.f32 %v1953, %v1759
    %1957 = vrot.lane.b32.xlu0 %v1954, 64
    %v1958 = vpop.permute.xlu0 %1957
    %v1960 = vmul.f32 %v1953, %v1958
    %1962 = vrot.lane.b32.xlu0 %v1960, 32
    %v1963 = vpop.permute.xlu0 %1962
    %v1965 = vadd.f32 %v1955, %v1963
    %v1966 = vtanh.pop %v1965
    %1968 = vrot.lane.b32.xlu0 %v1966, 64
    %v1969 = vpop.permute.xlu0 %1968
    %v1971 = vmul.f32 %v1953, %v1969
    %v1972 = vsel %vm1864, %v1971, %v1758
    %1974 = vrot.lane.b32.xlu0 %v1972, 32
    %v1975 = vpop.permute.xlu0 %1974
    %1977 = vst.msk [vmem:[#allocation11] sm:$0xff] %vm259, %v1975
    // Predicated region
    $region46: #{tpu_custom_call.1} parent=1 // pred_check
      _
    $region47: #{tpu_custom_call.1} parent=1 // pred_check_branch
      %1979 = sbr.rel (0) target = $region49
    $region48: #{tpu_custom_call.1} parent=1 // pred_region
      %s1981 = ssub.s32 128, 128
      %1982 = vsyncadd [#allocation5], %s1981
      %s1984 = sshll.u32 [#allocation11], 4
      %s1985 = int_to_ptr.vmem [resolvable:$true] %s1984
      %1987 = dma.vmem_to_hbm [thread:$0]  %s1985, 128, %s7, [#allocation5]
    $region49: #{tpu_custom_call.1} parent=1 // pred_fallthru
      _
    // Predicated region
    $region50: #{tpu_custom_call.1} parent=1 // pred_check
      _
    $region51: #{tpu_custom_call.1} parent=1 // pred_check_branch
      %1989 = sbr.rel (0) target = $region53
    $region52: #{tpu_custom_call.1} parent=1 // pred_region
      %1990 = dma.done [#allocation5], 128
    $region53: #{tpu_custom_call.1} parent=1 // pred_fallthru
      _
    %1991 = vsyncpa [#allocation4], 1
    %1992 = vsyncpa [#allocation7], 1
    %1993 = vsyncpa [#allocation10], 1
    %1994 = vsyncpa [#allocation5], 1

</llo_original>
